<compile_context>
chip_gen: v5e
topology: v5e:2x2
jax: 0.10.0
libtpu: 0.0.40
codegen_flags: <defaults>
</compile_context>

<pallas_src>
import functools
import math

import jax
import jax.numpy as jnp
from jax.experimental import pallas as pl
from jax.experimental.pallas import tpu as pltpu

# ----------------------------------------------------------------------------
# VGG19 `features` architecture table (same layer indexing as torchvision)
# ----------------------------------------------------------------------------
VGG19_CFG = [64, 64, 'M', 128, 128, 'M', 256, 256, 256, 256, 'M',
             512, 512, 512, 512, 'M', 512, 512, 512, 512, 'M']

IMAGENET_MEAN = (0.485, 0.456, 0.406)
IMAGENET_STD = (0.229, 0.224, 0.225)


def build_layer_table():
    """List of ('conv', c_in, c_out) | ('relu',) | ('pool',) matching
    torchvision.models.vgg19().features layer indices."""
    table = []
    c_in = 3
    for v in VGG19_CFG:
        if v == 'M':
            table.append(('pool',))
        else:
            table.append(('conv', c_in, v))
            table.append(('relu',))
            c_in = v
    return table


LAYER_TABLE = build_layer_table()


def get_min_size(layers):
    last_layer = max(layers)
    min_size = 1
    for layer in [4, 9, 18, 27, 36]:
        if last_layer < layer:
            break
        min_size *= 2
    return min_size


# ----------------------------------------------------------------------------
# VMEM-budget / tile-size helpers (padding-aware)
# ----------------------------------------------------------------------------
_LANE = 128
_SUBLANE = 8
_TILE_BUDGET = 18 * 1024 * 1024     # padded working-set budget per grid step
_VMEM_LIMIT = 40 * 1024 * 1024      # safe on v7x (64 MiB VMEM / TensorCore)


def _rup(v, m):
    return ((v + m - 1) // m) * m


def _blk_bytes(shape, itemsize, nbuf=2):
    """VMEM bytes for a block, padding the two minor dims to (8, 128) and
    accounting for double buffering."""
    if len(shape) == 1:
        return nbuf * _rup(shape[0] * itemsize, 512)
    *lead, s, l = shape
    n = 1
    for d in lead:
        n *= d
    return nbuf * n * _rup(s, _SUBLANE) * _rup(l, _LANE) * itemsize


def _conv_working_set(TH, W, C_in, C_out, fuse_pool, emit_preact):
    th_out = TH // 2 if fuse_pool else TH
    w_out = W // 2 if fuse_pool else W
    ws = 0
    ws += _blk_bytes((TH, W + 2, C_in), 2)               # core input rows (bf16)
    ws += _blk_bytes((2, W + 2, C_in), 2)                 # 2-row halo
    ws += _blk_bytes((3, 3 * C_in, C_out), 2)             # weights (double-buffered)
    ws += _blk_bytes((1, C_out), 4)                       # bias
    ws += _blk_bytes((th_out, w_out, C_out), 2)           # post output
    if emit_preact:
        ws += _blk_bytes((TH, W, C_out), 2)               # pre-activation output
    # In-kernel temporaries (single-buffered):
    ws += _blk_bytes((TH + 2, W + 2, C_in), 2, nbuf=1)    # concatenated halo slab
    ws += _blk_bytes((TH, W, 3 * C_in), 2, nbuf=1)        # im2col LHS (one kh live)
    ws += 2 * _blk_bytes((TH, W, C_out), 4, nbuf=1)       # f32 acc + epilogue temp
    return ws


def _select_row_tile(H, W, C_in, C_out, fuse_pool, emit_preact):
    """Largest even divisor of H whose padded working set fits the budget."""
    for th in range(H, 1, -1):
        if H % th or th % 2:
            continue
        if _conv_working_set(th, W, C_in, C_out, fuse_pool, emit_preact) <= _TILE_BUDGET:
            return th
    return 2


def _simple_row_tile(total_rows, bytes_per_row, budget=8 * 1024 * 1024):
    for tr in range(total_rows, 0, -1):
        if total_rows % tr == 0 and tr * bytes_per_row <= budget:
            return tr
    return 1


# ----------------------------------------------------------------------------
# Fused conv (+bias +ReLU +2x2-maxpool, optional pre-activation output) kernel
# ----------------------------------------------------------------------------
def _conv_block_kernel(xm_ref, xh_ref, w_ref, b_ref, *out_refs, TH, W, C_in,
                       TCO, apply_relu, fuse_pool, emit_preact):
    # xm_ref: (1, TH, W+2, C_in)   bf16  core rows of the padded activation
    # xh_ref: (1, 2,  W+2, C_in)   bf16  the 2 halo rows below the core block
    # w_ref : (3, 3*C_in, TCO)     bf16  per-kh weights, kw folded into K (resident)
    # b_ref : (1, TCO)             f32
    # out_refs[0]: (1, TH_out, W_out, TCO)  post-activation(/pool) output, bf16
    # out_refs[1]: (1, TH, W, TCO)          optional pre-activation output, bf16
    x = jnp.concatenate([xm_ref[0], xh_ref[0]], axis=0)        # (TH+2, W+2, C_in)

    acc = jnp.zeros((TH, W, TCO), jnp.float32)
    for kh in range(3):
        rows = x[kh:kh + TH]                                    # (TH, W+2, C_in)
        # Fold the 3 kw taps into the contraction dim: K = 3*C_in.  Each dot
        # produces exactly the accumulator tile -> plain `acc +=`.
        lhs = jnp.concatenate(
            [rows[:, kw:kw + W, :] for kw in range(3)], axis=2)  # (TH, W, 3*C_in)
        y = jnp.dot(lhs.reshape(TH * W, 3 * C_in), w_ref[kh],
                    preferred_element_type=jnp.float32)
        acc = acc + y.reshape(TH, W, TCO)

    acc = acc + b_ref[...].reshape(1, 1, TCO)
    if emit_preact:
        out_refs[1][0] = acc.astype(out_refs[1].dtype)
    if apply_relu:
        acc = jnp.maximum(acc, 0.0)
    if fuse_pool:
        acc = jnp.maximum(acc[0::2], acc[1::2])                  # row pairs
        acc = jnp.maximum(acc[:, 0::2, :], acc[:, 1::2, :])      # column pairs
    out_refs[0][0] = acc.astype(out_refs[0].dtype)


def conv_block(x, w_oihw, b, *, replicate_pad, fold_normalize, apply_relu,
               fuse_pool, emit_preact):
    N, H, W, C_in = x.shape
    C_out = int(w_oihw.shape[0])
    if H % 2 or W % 2:
        # TODO(synk): odd spatial sizes (PyTorch floor pooling) not supported.
        raise ValueError('conv_block requires even spatial dims')

    # --- weight preparation (tiny, plain XLA ops) ---------------------------
    w = jnp.transpose(w_oihw.astype(jnp.float32), (2, 3, 1, 0))     # OIHW -> HWIO
    b = b.astype(jnp.float32)
    if fold_normalize:
        # Exact fold of (x - mean)/std into the conv (valid under replicate pad).
        mean = jnp.asarray(IMAGENET_MEAN, jnp.float32)
        std = jnp.asarray(IMAGENET_STD, jnp.float32)
        b = b - jnp.einsum('hwio,i->o', w, mean / std)
        w = w / std.reshape(1, 1, C_in, 1)
    w_k = w.reshape(3, 3 * C_in, C_out).astype(jnp.bfloat16)        # kw folded into K
    b_k = b.reshape(1, C_out)

    TH = _select_row_tile(H, W, C_in, C_out, fuse_pool, emit_preact)
    T = H // TH
    # Keep >=2 parallel grid blocks for megacore on deep layers at batch 1.
    n_co = 2 if (N * T == 1 and C_out % 256 == 0) else 1
    TCO = C_out // n_co
    H_out = H // 2 if fuse_pool else H
    W_out = W // 2 if fuse_pool else W
    TH_out = TH // 2 if fuse_pool else TH
    th_half = TH // 2

    # Padded activation stays a single HBM array; the kernel reads a
    # non-overlapping TH-row core block plus a 2-row halo block, so the
    # activation crosses HBM ~once (no overlapping-slab gather).
    mode = 'edge' if replicate_pad else 'constant'
    xp = jnp.pad(x.astype(jnp.bfloat16), ((0, 0), (1, 1), (1, 1), (0, 0)),
                 mode=mode)

    post_sds = jax.ShapeDtypeStruct((N, H_out, W_out, C_out), jnp.bfloat16)
    post_spec = pl.BlockSpec((1, TH_out, W_out, TCO),
                             lambda n, t, c: (n, t, 0, c))
    if emit_preact:
        pre_sds = jax.ShapeDtypeStruct((N, H, W, C_out), jnp.bfloat16)
        out_shape = (post_sds, pre_sds)
        out_specs = (post_spec,
                     pl.BlockSpec((1, TH, W, TCO), lambda n, t, c: (n, t, 0, c)))
    else:
        out_shape = post_sds
        out_specs = post_spec

    flops = 2 * 9 * N * H * W * C_in * C_out
    bytes_accessed = (xp.size * 2 + w_k.size * 2 + b_k.size * 4
                      + N * H_out * W_out * C_out * 2
                      + (N * H * W * C_out * 2 if emit_preact else 0))

    kernel = functools.partial(
        _conv_block_kernel, TH=TH, W=W, C_in=C_in, TCO=TCO,
        apply_relu=apply_relu, fuse_pool=fuse_pool, emit_preact=emit_preact)

    return pl.pallas_call(
        kernel,
        out_shape=out_shape,
        grid=(N, T, n_co),
        in_specs=[
            # Core TH rows of the padded activation (non-overlapping blocks).
            pl.BlockSpec((1, TH, W + 2, C_in), lambda n, t, c: (n, t, 0, 0)),
            # The 2 halo rows directly below the core block.
            pl.BlockSpec((1, 2, W + 2, C_in),
                         lambda n, t, c: (n, (t + 1) * th_half, 0, 0)),
            # Weights / bias: constant along (n, t) -> resident across row tiles.
            pl.BlockSpec((3, 3 * C_in, TCO), lambda n, t, c: (0, 0, c)),
            pl.BlockSpec((1, TCO), lambda n, t, c: (0, c)),
        ],
        out_specs=out_specs,
        compiler_params=pltpu.CompilerParams(
            dimension_semantics=("parallel", "parallel", "parallel"),
            vmem_limit_bytes=_VMEM_LIMIT),
        cost_estimate=pl.CostEstimate(flops=int(flops), transcendentals=0,
                                      bytes_accessed=int(bytes_accessed)),
    )(xp, xp, w_k, b_k)


# ----------------------------------------------------------------------------
# Standalone ReLU / max-pool kernels (only used when fusion is impossible,
# e.g. a pre-pool ReLU feature was explicitly requested)
# ----------------------------------------------------------------------------
def _relu_kernel(x_ref, o_ref):
    o_ref[...] = jnp.maximum(x_ref[...], 0).astype(o_ref.dtype)


def relu(x):
    N, H, W, C = x.shape
    TR = _simple_row_tile(H, 4 * _rup(W, 8) * _rup(C, _LANE) * x.dtype.itemsize)
    return pl.pallas_call(
        _relu_kernel,
        out_shape=jax.ShapeDtypeStruct(x.shape, x.dtype),
        grid=(N, H // TR),
        in_specs=[pl.BlockSpec((1, TR, W, C), lambda n, t: (n, t, 0, 0))],
        out_specs=pl.BlockSpec((1, TR, W, C), lambda n, t: (n, t, 0, 0)),
        compiler_params=pltpu.CompilerParams(
            dimension_semantics=("parallel", "parallel")),
    )(x)


def _maxpool_kernel(x_ref, o_ref):
    x = x_ref[0]                                     # (2*TR, W, C)
    x = jnp.maximum(x[0::2], x[1::2])                # row pairs
    x = jnp.maximum(x[:, 0::2, :], x[:, 1::2, :])    # column pairs (strided max)
    o_ref[0] = x.astype(o_ref.dtype)


def maxpool2x2(x):
    N, H, W, C = x.shape
    Ho, Wo = H // 2, W // 2
    per_row = 4 * 3 * _rup(W, 8) * _rup(C, _LANE) * x.dtype.itemsize
    TR = _simple_row_tile(Ho, per_row)
    return pl.pallas_call(
        _maxpool_kernel,
        out_shape=jax.ShapeDtypeStruct((N, Ho, Wo, C), x.dtype),
        grid=(N, Ho // TR),
        in_specs=[pl.BlockSpec((1, 2 * TR, W, C), lambda n, t: (n, t, 0, 0))],
        out_specs=pl.BlockSpec((1, TR, Wo, C), lambda n, t: (n, t, 0, 0)),
        compiler_params=pltpu.CompilerParams(
            dimension_semantics=("parallel", "parallel")),
    )(x)


# ----------------------------------------------------------------------------
# Parameter init (deterministic, synthetic) and forward pass
# ----------------------------------------------------------------------------
def init_params(key, max_layer):
    # TODO(synk): pretrained torchvision VGG19 weights are not loadable here.
    params = {}
    for i in range(max_layer + 1):
        spec = LAYER_TABLE[i]
        if spec[0] == 'conv':
            _, c_in, c_out = spec
            key, kw_, kb_ = jax.random.split(key, 3)
            # PyTorch Conv2d weight layout (C_out, C_in, 3, 3), float32.
            w = jax.random.normal(kw_, (c_out, c_in, 3, 3), jnp.float32)
            w = w * (1.0 / math.sqrt(9.0 * c_in))
            b = jax.random.normal(kb_, (c_out,), jnp.float32) * 0.01
            params[i] = (w, b)
    return params


def _to_nchw(x_nhwc):
    return jnp.transpose(x_nhwc.astype(jnp.float32), (0, 3, 1, 2))


def vgg_features(x_nchw, params, layers):
    layers = sorted(set(layers))
    last = max(layers)
    h, w = x_nchw.shape[2:4]
    min_size = get_min_size(layers)
    if min(h, w) < min_size:
        raise ValueError(
            f'Input is {h}x{w} but must be at least {min_size}x{min_size}')

    feats = {'input': x_nchw}
    x = jnp.transpose(x_nchw, (0, 2, 3, 1))          # NCHW -> NHWC

    i = 0
    while i <= last:
        kind = LAYER_TABLE[i][0]
        if kind == 'conv':
            w_, b_ = params[i]
            first = (i == 0)
            if i == last:
                # Pre-ReLU conv output is the final requested layer.
                x = conv_block(x, w_, b_, replicate_pad=first,
                               fold_normalize=first, apply_relu=False,
                               fuse_pool=False, emit_preact=False)
                feats[i] = _to_nchw(x)
                break
            relu_idx, pool_idx = i + 1, i + 2
            want_pre = i in layers
            fuse_pool = (pool_idx <= last
                         and LAYER_TABLE[pool_idx][0] == 'pool'
                         and relu_idx not in layers)
            out = conv_block(x, w_, b_, replicate_pad=first,
                             fold_normalize=first, apply_relu=True,
                             fuse_pool=fuse_pool, emit_preact=want_pre)
            if want_pre:
                x, pre = out
                feats[i] = _to_nchw(pre)
            else:
                x = out
            if fuse_pool:
                if pool_idx in layers:
                    feats[pool_idx] = _to_nchw(x)
                i = pool_idx + 1
            else:
                if relu_idx in layers:
                    feats[relu_idx] = _to_nchw(x)
                i = relu_idx + 1
        elif kind == 'relu':         # normally consumed by the conv fusion
            x = relu(x)
            if i in layers:
                feats[i] = _to_nchw(x)
            i += 1
        else:                        # unfused pool (pre-pool ReLU was recorded)
            x = maxpool2x2(x)
            if i in layers:
                feats[i] = _to_nchw(x)
            i += 1
    return feats


if __name__ == "__main__":
    layers = [1, 4, 6]               # relu1_1, pool1, relu2_1 in VGG19 indexing
    key = jax.random.PRNGKey(0)
    kx, kp = jax.random.split(key)
    x = jax.random.uniform(kx, (2, 3, 16, 16), jnp.float32)   # NCHW like PyTorch
    params = init_params(kp, max(layers))

    feats = vgg_features(x, params, layers)
    # feats has mixed str/int keys (like the PyTorch module) -> block on values.
    jax.block_until_ready(list(feats.values()))

    assert feats['input'].shape == (2, 3, 16, 16)
    assert feats[1].shape == (2, 64, 16, 16)
    assert feats[4].shape == (2, 64, 8, 8)
    assert feats[6].shape == (2, 128, 8, 8)
    assert all(bool(jnp.all(jnp.isfinite(v))) for v in feats.values())
    print("KERNEL_OK")
</pallas_src>

<mosaic_0001>
module attributes {stable_mosaic.version = 11 : i64} {
  func.func @_conv_block_kernel(%arg0: i32, %arg1: i32, %arg2: i32, %arg3: memref<1x16x18x3xbf16, #tpu.memory_space<vmem>>, %arg4: memref<1x2x18x3xbf16, #tpu.memory_space<vmem>>, %arg5: memref<3x9x64xbf16, #tpu.memory_space<vmem>>, %arg6: memref<1x64xf32, #tpu.memory_space<vmem>>, %arg7: memref<1x16x16x64xbf16, #tpu.memory_space<vmem>>) attributes {dimension_semantics = [#tpu.dimension_semantics<parallel>, #tpu.dimension_semantics<parallel>, #tpu.dimension_semantics<parallel>], iteration_bounds = array<i64: 2, 1, 1>, scalar_prefetch = 0 : i64, scratch_operands = 0 : i64, tpu.core_type = #tpu.core_type<tc>, window_params = [{transform_indices = @transform_0, window_bounds = array<i64: 1, 16, 18, 3>}, {transform_indices = @transform_1, window_bounds = array<i64: 1, 2, 18, 3>}, {transform_indices = @transform_2, window_bounds = array<i64: 3, 9, 64>}, {transform_indices = @transform_3, window_bounds = array<i64: 1, 64>}, {transform_indices = @transform_4, window_bounds = array<i64: 1, 16, 16, 64>}]} {
    %c0 = arith.constant 0 : index
    %c0_0 = arith.constant 0 : index
    %c0_1 = arith.constant 0 : index
    %c0_2 = arith.constant 0 : index
    %0 = vector.load %arg3[%c0, %c0_0, %c0_1, %c0_2] : memref<1x16x18x3xbf16, #tpu.memory_space<vmem>>, vector<1x16x18x3xbf16>
    %1 = vector.shape_cast %0 : vector<1x16x18x3xbf16> to vector<16x18x3xbf16>
    %c0_3 = arith.constant 0 : index
    %c0_4 = arith.constant 0 : index
    %c0_5 = arith.constant 0 : index
    %c0_6 = arith.constant 0 : index
    %2 = vector.load %arg4[%c0_3, %c0_4, %c0_5, %c0_6] : memref<1x2x18x3xbf16, #tpu.memory_space<vmem>>, vector<1x2x18x3xbf16>
    %3 = vector.shape_cast %2 : vector<1x2x18x3xbf16> to vector<2x18x3xbf16>
    %4 = tpu.concatenate %1, %3 in 0 : vector<16x18x3xbf16>, vector<2x18x3xbf16> -> vector<18x18x3xbf16>
    %cst = arith.constant 0.000000e+00 : f32
    %5 = vector.broadcast %cst : f32 to vector<16x16x64xf32>
    %6 = vector.extract_strided_slice %4 {offsets = [0, 0, 0], sizes = [16, 18, 3], strides = [1, 1, 1]} : vector<18x18x3xbf16> to vector<16x18x3xbf16>
    %7 = vector.extract_strided_slice %6 {offsets = [0, 0, 0], sizes = [16, 16, 3], strides = [1, 1, 1]} : vector<16x18x3xbf16> to vector<16x16x3xbf16>
    %8 = vector.extract_strided_slice %6 {offsets = [0, 1, 0], sizes = [16, 16, 3], strides = [1, 1, 1]} : vector<16x18x3xbf16> to vector<16x16x3xbf16>
    %9 = vector.extract_strided_slice %6 {offsets = [0, 2, 0], sizes = [16, 16, 3], strides = [1, 1, 1]} : vector<16x18x3xbf16> to vector<16x16x3xbf16>
    %10 = tpu.concatenate %7, %8, %9 in 2 : vector<16x16x3xbf16>, vector<16x16x3xbf16>, vector<16x16x3xbf16> -> vector<16x16x9xbf16>
    %11 = vector.shape_cast %10 : vector<16x16x9xbf16> to vector<256x9xbf16>
    %c0_7 = arith.constant 0 : index
    %c0_8 = arith.constant 0 : index
    %c0_9 = arith.constant 0 : index
    %12 = vector.load %arg5[%c0_7, %c0_8, %c0_9] : memref<3x9x64xbf16, #tpu.memory_space<vmem>>, vector<1x9x64xbf16>
    %13 = vector.shape_cast %12 : vector<1x9x64xbf16> to vector<9x64xbf16>
    %cst_10 = arith.constant dense<0.000000e+00> : vector<256x64xf32>
    %14 = tpu.matmul %11, %13, %cst_10 {dimension_numbers = #tpu.dot_dimension_numbers<[1], [0], [0], [1], [0, 0, 1, 1], [], []>} : vector<256x9xbf16>, vector<9x64xbf16>, vector<256x64xf32> -> vector<256x64xf32>
    %15 = vector.shape_cast %14 : vector<256x64xf32> to vector<16x16x64xf32>
    %16 = arith.addf %5, %15 : vector<16x16x64xf32>
    %17 = vector.extract_strided_slice %4 {offsets = [1, 0, 0], sizes = [16, 18, 3], strides = [1, 1, 1]} : vector<18x18x3xbf16> to vector<16x18x3xbf16>
    %18 = vector.extract_strided_slice %17 {offsets = [0, 0, 0], sizes = [16, 16, 3], strides = [1, 1, 1]} : vector<16x18x3xbf16> to vector<16x16x3xbf16>
    %19 = vector.extract_strided_slice %17 {offsets = [0, 1, 0], sizes = [16, 16, 3], strides = [1, 1, 1]} : vector<16x18x3xbf16> to vector<16x16x3xbf16>
    %20 = vector.extract_strided_slice %17 {offsets = [0, 2, 0], sizes = [16, 16, 3], strides = [1, 1, 1]} : vector<16x18x3xbf16> to vector<16x16x3xbf16>
    %21 = tpu.concatenate %18, %19, %20 in 2 : vector<16x16x3xbf16>, vector<16x16x3xbf16>, vector<16x16x3xbf16> -> vector<16x16x9xbf16>
    %22 = vector.shape_cast %21 : vector<16x16x9xbf16> to vector<256x9xbf16>
    %c1 = arith.constant 1 : index
    %c0_11 = arith.constant 0 : index
    %c0_12 = arith.constant 0 : index
    %23 = vector.load %arg5[%c1, %c0_11, %c0_12] : memref<3x9x64xbf16, #tpu.memory_space<vmem>>, vector<1x9x64xbf16>
    %24 = vector.shape_cast %23 : vector<1x9x64xbf16> to vector<9x64xbf16>
    %cst_13 = arith.constant dense<0.000000e+00> : vector<256x64xf32>
    %25 = tpu.matmul %22, %24, %cst_13 {dimension_numbers = #tpu.dot_dimension_numbers<[1], [0], [0], [1], [0, 0, 1, 1], [], []>} : vector<256x9xbf16>, vector<9x64xbf16>, vector<256x64xf32> -> vector<256x64xf32>
    %26 = vector.shape_cast %25 : vector<256x64xf32> to vector<16x16x64xf32>
    %27 = arith.addf %16, %26 : vector<16x16x64xf32>
    %28 = vector.extract_strided_slice %4 {offsets = [2, 0, 0], sizes = [16, 18, 3], strides = [1, 1, 1]} : vector<18x18x3xbf16> to vector<16x18x3xbf16>
    %29 = vector.extract_strided_slice %28 {offsets = [0, 0, 0], sizes = [16, 16, 3], strides = [1, 1, 1]} : vector<16x18x3xbf16> to vector<16x16x3xbf16>
    %30 = vector.extract_strided_slice %28 {offsets = [0, 1, 0], sizes = [16, 16, 3], strides = [1, 1, 1]} : vector<16x18x3xbf16> to vector<16x16x3xbf16>
    %31 = vector.extract_strided_slice %28 {offsets = [0, 2, 0], sizes = [16, 16, 3], strides = [1, 1, 1]} : vector<16x18x3xbf16> to vector<16x16x3xbf16>
    %32 = tpu.concatenate %29, %30, %31 in 2 : vector<16x16x3xbf16>, vector<16x16x3xbf16>, vector<16x16x3xbf16> -> vector<16x16x9xbf16>
    %33 = vector.shape_cast %32 : vector<16x16x9xbf16> to vector<256x9xbf16>
    %c2 = arith.constant 2 : index
    %c0_14 = arith.constant 0 : index
    %c0_15 = arith.constant 0 : index
    %34 = vector.load %arg5[%c2, %c0_14, %c0_15] : memref<3x9x64xbf16, #tpu.memory_space<vmem>>, vector<1x9x64xbf16>
    %35 = vector.shape_cast %34 : vector<1x9x64xbf16> to vector<9x64xbf16>
    %cst_16 = arith.constant dense<0.000000e+00> : vector<256x64xf32>
    %36 = tpu.matmul %33, %35, %cst_16 {dimension_numbers = #tpu.dot_dimension_numbers<[1], [0], [0], [1], [0, 0, 1, 1], [], []>} : vector<256x9xbf16>, vector<9x64xbf16>, vector<256x64xf32> -> vector<256x64xf32>
    %37 = vector.shape_cast %36 : vector<256x64xf32> to vector<16x16x64xf32>
    %38 = arith.addf %27, %37 : vector<16x16x64xf32>
    %c0_17 = arith.constant 0 : index
    %c0_18 = arith.constant 0 : index
    %39 = vector.load %arg6[%c0_17, %c0_18] : memref<1x64xf32, #tpu.memory_space<vmem>>, vector<1x64xf32>
    %40 = vector.shape_cast %39 : vector<1x64xf32> to vector<1x1x64xf32>
    %41 = vector.broadcast %40 : vector<1x1x64xf32> to vector<16x16x64xf32>
    %42 = arith.addf %38, %41 : vector<16x16x64xf32>
    %cst_19 = arith.constant 0.000000e+00 : f32
    %43 = vector.broadcast %cst_19 : f32 to vector<16x16x64xf32>
    %44 = arith.maximumf %42, %43 : vector<16x16x64xf32>
    %45 = arith.truncf %44 : vector<16x16x64xf32> to vector<16x16x64xbf16>
    %c0_20 = arith.constant 0 : index
    %c0_21 = arith.constant 0 : index
    %c0_22 = arith.constant 0 : index
    %c0_23 = arith.constant 0 : index
    %46 = vector.load %arg7[%c0_20, %c0_21, %c0_22, %c0_23] : memref<1x16x16x64xbf16, #tpu.memory_space<vmem>>, vector<1x16x16x64xbf16>
    %47 = vector.shape_cast %46 : vector<1x16x16x64xbf16> to vector<16x16x64xbf16>
    %48 = vector.shape_cast %45 : vector<16x16x64xbf16> to vector<1x16x16x64xbf16>
    tpu.vector_store %arg7[%c0_20, %c0_21, %c0_22, %c0_23], %48 {strides = array<i32>} : memref<1x16x16x64xbf16, #tpu.memory_space<vmem>>, vector<1x16x16x64xbf16>,
    return
  }
  func.func @transform_0(%arg0: i32, %arg1: i32, %arg2: i32) -> (i32, i32, i32, i32) {
    %c0_i32 = arith.constant 0 : i32
    %c0_i32_0 = arith.constant 0 : i32
    %c0_i32_1 = arith.constant 0 : i32
    return %arg0, %arg1, %c0_i32, %c0_i32_0 : i32, i32, i32, i32
  }
  func.func @transform_1(%arg0: i32, %arg1: i32, %arg2: i32) -> (i32, i32, i32, i32) {
    %c1_i32 = arith.constant 1 : i32
    %0 = arith.addi %arg1, %c1_i32 : i32
    %c8_i32 = arith.constant 8 : i32
    %1 = arith.muli %0, %c8_i32 : i32
    %c0_i32 = arith.constant 0 : i32
    %c0_i32_0 = arith.constant 0 : i32
    %c0_i32_1 = arith.constant 0 : i32
    return %arg0, %1, %c0_i32, %c0_i32_0 : i32, i32, i32, i32
  }
  func.func @transform_2(%arg0: i32, %arg1: i32, %arg2: i32) -> (i32, i32, i32) {
    %c0_i32 = arith.constant 0 : i32
    %c0_i32_0 = arith.constant 0 : i32
    %c0_i32_1 = arith.constant 0 : i32
    return %c0_i32, %c0_i32_0, %arg2 : i32, i32, i32
  }
  func.func @transform_3(%arg0: i32, %arg1: i32, %arg2: i32) -> (i32, i32) {
    %c0_i32 = arith.constant 0 : i32
    %c0_i32_0 = arith.constant 0 : i32
    return %c0_i32, %arg2 : i32, i32
  }
  func.func @transform_4(%arg0: i32, %arg1: i32, %arg2: i32) -> (i32, i32, i32, i32) {
    %c0_i32 = arith.constant 0 : i32
    %c0_i32_0 = arith.constant 0 : i32
    return %arg0, %arg1, %c0_i32, %arg2 : i32, i32, i32, i32
  }
}

</mosaic_0001>

<llo_original>
// kernel: tpu_custom_call.1
$region0: #{tpu_custom_call.1}
  #allocation0 [shape = 'u32[]', space=smem, size = 0x4, offset = 0x4, fixed_abs, tag = 'smem constant byte address 0x4 - core index']
  #allocation1 [shape = 'u32[72,128]{1,0:T(1,128)}', space=vmem, size = 0x9000, scoped, tag = 'internal scratch']
  %s0 = inlined_call_operand.vmem [shape: bf16[2,18,18,3], index: 0, kind: input, shape index: {}]
  %s1 = inlined_call_operand.vmem [shape: bf16[2,18,18,3], index: 1, kind: input, shape index: {}]
  %s2 = inlined_call_operand.vmem [shape: bf16[3,9,64], index: 2, kind: input, shape index: {}]
  %s3 = inlined_call_operand.vmem [shape: f32[1,64], index: 3, kind: input, shape index: {}]
  %s4 = inlined_call_operand.hbm [shape: bf16[2,16,16,64], index: 4, kind: output, shape index: {}]
  %s5 = sld [smem:[#allocation0]]
  $region49: #{tpu_custom_call.1} parent=0
    _
  %s7 = ssub.s32 1, %s5
  %s8 = scalar_select 0, %s7, %s5
  $region1: #{tpu_custom_call.1} parent=0
    #allocation2 [shape = 'u8[131072]{0}', space=vmem, size = 0x20000, scoped, tag = 'output window, operand 0']
    #allocation3 [shape = 's32[2]{0}', space=sflag, size = 0x8, scoped, tag = 'scoped memory for tpu_custom_call.1']
    %9 = vsyncpa [#allocation3], 0
    %s10 = scalar_lea.sflag [#allocation3], 1
    %11 = vsyncpa %s10, 0
    loop: start=0, step=1, limit=4
    $region2: #{tpu_custom_call.1} parent=1 // loop_pre_header
      _
    $region3: #{tpu_custom_call.1} parent=1 // loop_header
      %s13 = sphi 0, %s17
      %p14 = scmp.ge.s32.totalorder %s13, 4
      %s20 = sphi 0, %s39
      %s21 = sphi 0, %s35
      %s22 = sphi 0, %s31
      %s23 = sphi 0, %s20
      %s24 = sphi 0, %s21
      %s25 = sphi 0, %s22
      %s26 = sphi 0, %s23
      %s27 = sphi 0, %s24
      %s28 = sphi 0, %s25
      %s44 = sphi 0, %s46
      %s47 = sphi 0, %s44
      %s48 = sphi 0, %s47
      %s64 = sphi 0, %s48
      %s76 = sphi 0, %s78
      %s79 = sphi 0, %s76
      %s80 = sphi 0, %s79
      %s96 = sphi 0, %s80
      %s102 = sphi 0, %s104
      %s105 = sphi 0, %s102
      %s106 = sphi 0, %s105
      %s122 = sphi 0, %s106
      %s128 = sphi 0, %s130
      %s131 = sphi 0, %s128
      %s132 = sphi 0, %s131
      %s148 = sphi 0, %s132
      %s158 = sphi 0, %s160
      %s161 = sphi 0, %s158
      %s162 = sphi 0, %s161
      %s178 = sphi 0, %s162
    $region4: #{tpu_custom_call.1} parent=1 // loop_header_branch
      %16 = sbr.rel (%p14) target = $region8
    $region5: #{tpu_custom_call.1} parent=1 // loop_body
      %s18 = ssub.s32 %s13, 1
      %s19 = ssub.s32 %s13, 2
      %s29 = sadd.s32 1, %s22
      %p30 = scmp.ge.s32.totalorder %s29, 1
      %s31 = scalar_select %p30, 0, %s29
      %s32 = sadd.s32 1, %s21
      %s33 = scalar_select %p30, %s32, %s21
      %p34 = scmp.ge.s32.totalorder %s33, 1
      %s35 = scalar_select %p34, 0, %s33
      %s36 = sadd.s32 1, %s20
      %s37 = scalar_select %p34, %s36, %s20
      %p38 = scmp.ge.s32.totalorder %s37, 2
      %s39 = scalar_select %p38, 0, %s37
      %s40 = ssub.s32 %s20, %s39
      %s41 = ssub.s32 %s21, %s35
      %s42 = sor.u32 %s40, %s41
      %p43 = scmp.eq.s32.totalorder %s42, 0
      %s45 = sadd.s32 %s44, 1
      %s46 = scalar_select %p43, %s44, %s45
      %p49 = pneg %p43
      %p50 = scmp.eq.s32.totalorder %s13, 1
      %p51 = por %p49, %p50
      %p52 = scmp.ne.s32.totalorder %s44, %s47
      %p53 = scmp.eq.s32.totalorder %s13, 0
      %p54 = por %p52, %p53
      %p55 = scmp.ne.s32.totalorder %s44, %s47
      %p56 = scmp.eq.s32.totalorder %s18, 1
      %p57 = por %p55, %p56
      %p58 = scmp.ne.s32.totalorder %s47, %s48
      %p59 = scmp.eq.s32.totalorder %s18, 0
      %p60 = por %p58, %p59
      %p61 = scmp.ne.s32.totalorder %s47, %s48
      %p62 = scmp.eq.s32.totalorder %s19, 1
      %p63 = por %p61, %p62
      %p65 = scmp.ne.s32.totalorder %s48, %s64
      %p66 = scmp.eq.s32.totalorder %s19, 0
      %p67 = por %p65, %p66
      %s68 = sadd.s32 %s21, 1
      %s69 = smul.u32 %s68, 8
      %s70 = sadd.s32 %s35, 1
      %s71 = smul.u32 %s70, 8
      %s72 = ssub.s32 %s20, %s39
      %s73 = ssub.s32 %s69, %s71
      %s74 = sor.u32 %s72, %s73
      %p75 = scmp.eq.s32.totalorder %s74, 0
      %s77 = sadd.s32 %s76, 1
      %s78 = scalar_select %p75, %s76, %s77
      %p81 = pneg %p75
      %p82 = scmp.eq.s32.totalorder %s13, 1
      %p83 = por %p81, %p82
      %p84 = scmp.ne.s32.totalorder %s76, %s79
      %p85 = scmp.eq.s32.totalorder %s13, 0
      %p86 = por %p84, %p85
      %p87 = scmp.ne.s32.totalorder %s76, %s79
      %p88 = scmp.eq.s32.totalorder %s18, 1
      %p89 = por %p87, %p88
      %p90 = scmp.ne.s32.totalorder %s79, %s80
      %p91 = scmp.eq.s32.totalorder %s18, 0
      %p92 = por %p90, %p91
      %p93 = scmp.ne.s32.totalorder %s79, %s80
      %p94 = scmp.eq.s32.totalorder %s19, 1
      %p95 = por %p93, %p94
      %p97 = scmp.ne.s32.totalorder %s80, %s96
      %p98 = scmp.eq.s32.totalorder %s19, 0
      %p99 = por %p97, %p98
      %s100 = ssub.s32 %s22, %s31
      %p101 = scmp.eq.s32.totalorder %s100, 0
      %s103 = sadd.s32 %s102, 1
      %s104 = scalar_select %p101, %s102, %s103
      %p107 = pneg %p101
      %p108 = scmp.eq.s32.totalorder %s13, 1
      %p109 = por %p107, %p108
      %p110 = scmp.ne.s32.totalorder %s102, %s105
      %p111 = scmp.eq.s32.totalorder %s13, 0
      %p112 = por %p110, %p111
      %p113 = scmp.ne.s32.totalorder %s102, %s105
      %p114 = scmp.eq.s32.totalorder %s18, 1
      %p115 = por %p113, %p114
      %p116 = scmp.ne.s32.totalorder %s105, %s106
      %p117 = scmp.eq.s32.totalorder %s18, 0
      %p118 = por %p116, %p117
      %p119 = scmp.ne.s32.totalorder %s105, %s106
      %p120 = scmp.eq.s32.totalorder %s19, 1
      %p121 = por %p119, %p120
      %p123 = scmp.ne.s32.totalorder %s106, %s122
      %p124 = scmp.eq.s32.totalorder %s19, 0
      %p125 = por %p123, %p124
      %s126 = ssub.s32 %s22, %s31
      %p127 = scmp.eq.s32.totalorder %s126, 0
      %s129 = sadd.s32 %s128, 1
      %s130 = scalar_select %p127, %s128, %s129
      %p133 = pneg %p127
      %p134 = scmp.eq.s32.totalorder %s13, 1
      %p135 = por %p133, %p134
      %p136 = scmp.ne.s32.totalorder %s128, %s131
      %p137 = scmp.eq.s32.totalorder %s13, 0
      %p138 = por %p136, %p137
      %p139 = scmp.ne.s32.totalorder %s128, %s131
      %p140 = scmp.eq.s32.totalorder %s18, 1
      %p141 = por %p139, %p140
      %p142 = scmp.ne.s32.totalorder %s131, %s132
      %p143 = scmp.eq.s32.totalorder %s18, 0
      %p144 = por %p142, %p143
      %p145 = scmp.ne.s32.totalorder %s131, %s132
      %p146 = scmp.eq.s32.totalorder %s19, 1
      %p147 = por %p145, %p146
      %p149 = scmp.ne.s32.totalorder %s132, %s148
      %p150 = scmp.eq.s32.totalorder %s19, 0
      %p151 = por %p149, %p150
      %s152 = ssub.s32 %s20, %s39
      %s153 = ssub.s32 %s21, %s35
      %s154 = sor.u32 %s152, %s153
      %s155 = ssub.s32 %s22, %s31
      %s156 = sor.u32 %s154, %s155
      %p157 = scmp.eq.s32.totalorder %s156, 0
      %s159 = sadd.s32 %s158, 1
      %s160 = scalar_select %p157, %s158, %s159
      %p163 = pneg %p157
      %p164 = scmp.eq.s32.totalorder %s13, 1
      %p165 = por %p163, %p164
      %p166 = scmp.ne.s32.totalorder %s158, %s161
      %p167 = scmp.eq.s32.totalorder %s13, 0
      %p168 = por %p166, %p167
      %p169 = scmp.ne.s32.totalorder %s158, %s161
      %p170 = scmp.eq.s32.totalorder %s18, 1
      %p171 = por %p169, %p170
      %p172 = scmp.ne.s32.totalorder %s161, %s162
      %p173 = scmp.eq.s32.totalorder %s18, 0
      %p174 = por %p172, %p173
      %p175 = scmp.ne.s32.totalorder %s161, %s162
      %p176 = scmp.eq.s32.totalorder %s19, 1
      %p177 = por %p175, %p176
      %p179 = scmp.ne.s32.totalorder %s162, %s178
      %p180 = scmp.eq.s32.totalorder %s19, 0
      %p181 = por %p179, %p180
      %p182 = scmp.le.s32.totalorder 1, %s13
      %p183 = scmp.lt.s32.totalorder %s13, 3
      %p184 = pnand %p182, %p183
      %p185 = pneg %p184
      // Predicated region
      $region9: #{tpu_custom_call.1} parent=5 // pred_check
        _
      $region10: #{tpu_custom_call.1} parent=5 // pred_check_branch
        %187 = sbr.rel (%p184) target = $region12
      $region11: #{tpu_custom_call.1} parent=5 // pred_region
        %s188 = ssub.s32 %s13, 1
        // Predicated region
        $region13: #{tpu_custom_call.1} parent=11 // pred_check
          %p189 = pneg %p118
        $region14: #{tpu_custom_call.1} parent=11 // pred_check_branch
          %191 = sbr.rel (%p189) target = $region16
        $region15: #{tpu_custom_call.1} parent=11 // pred_region
          %p192 = scmp.lt.s32.totalorder %s25, 0
          %s193 = scalar_select %p192, %s25, 0
          %s194 = smul.addr %s193, 4
          %s195 = scalar_lea.vmem %s2, %s194
        $region16: #{tpu_custom_call.1} parent=11 // pred_fallthru
          _
        // Predicated region
        $region17: #{tpu_custom_call.1} parent=11 // pred_check
          %p196 = pneg %p144
        $region18: #{tpu_custom_call.1} parent=11 // pred_check_branch
          %198 = sbr.rel (%p196) target = $region20
        $region19: #{tpu_custom_call.1} parent=11 // pred_region
          %p199 = scmp.lt.s32.totalorder %s25, 0
          %s200 = scalar_select %p199, %s25, 0
          %s201 = scalar_lea.vmem %s3, %s200
        $region20: #{tpu_custom_call.1} parent=11 // pred_fallthru
          _
      $region12: #{tpu_custom_call.1} parent=5 // pred_fallthru
        _
      %p202 = scmp.lt.s32.totalorder %s13, 2
      // Predicated region
      $region21: #{tpu_custom_call.1} parent=5 // pred_check
        %p203 = pneg %p202
      $region22: #{tpu_custom_call.1} parent=5 // pred_check_branch
        %205 = sbr.rel (%p203) target = $region24
      $region23: #{tpu_custom_call.1} parent=5 // pred_region
        // Predicated region
        $region25: #{tpu_custom_call.1} parent=23 // pred_check
          %p206 = pneg %p54
        $region26: #{tpu_custom_call.1} parent=23 // pred_check_branch
          %208 = sbr.rel (%p206) target = $region28
        $region27: #{tpu_custom_call.1} parent=23 // pred_region
          %s209 = smul.u32 16, %s21
          %s210 = ssub.s32 18, %s209
          %p211 = scmp.lt.s32.totalorder %s210, 16
          %s212 = scalar_select %p211, %s210, 16
          %s213 = smul.u32 4, %s212
          %s214 = smul.u32 %s213, 3
          %p215 = scmp.lt.s32.totalorder %s20, 1
          %s216 = scalar_select %p215, %s20, 1
          %p217 = scmp.lt.s32.totalorder %s209, 17
          %s218 = scalar_select %p217, %s209, 17
          %s219 = smul.addr %s218, 3
          %s220 = smul.addr %s216, 54
          %s221 = sadd.s32 %s219, %s220
          %s222 = smul.addr %s221, 4
          %s223 = scalar_lea.vmem %s0, %s222
          %s224 = smul.u32 16, %s21
          %s225 = ssub.s32 18, %s224
          %p226 = scmp.lt.s32.totalorder %s225, 16
          %s227 = scalar_select %p226, %s225, 16
          %s228 = smul.u32 4, %s227
          %s229 = smul.u32 %s228, 3
        $region28: #{tpu_custom_call.1} parent=23 // pred_fallthru
          _
        // Predicated region
        $region29: #{tpu_custom_call.1} parent=23 // pred_check
          %p230 = pneg %p86
        $region30: #{tpu_custom_call.1} parent=23 // pred_check_branch
          %232 = sbr.rel (%p230) target = $region32
        $region31: #{tpu_custom_call.1} parent=23 // pred_region
          %s233 = sadd.s32 %s21, 1
          %s234 = smul.u32 %s233, 8
          %s235 = smul.u32 2, %s234
          %p236 = scmp.lt.s32.totalorder %s20, 1
          %s237 = scalar_select %p236, %s20, 1
          %p238 = scmp.lt.s32.totalorder %s235, 17
          %s239 = scalar_select %p238, %s235, 17
          %s240 = smul.addr %s239, 3
          %s241 = smul.addr %s237, 54
          %s242 = sadd.s32 %s240, %s241
          %s243 = smul.addr %s242, 4
          %s244 = scalar_lea.vmem %s1, %s243
          %s245 = sadd.s32 %s21, 1
          %s246 = smul.u32 %s245, 8
          %s247 = smul.u32 2, %s246
        $region32: #{tpu_custom_call.1} parent=23 // pred_fallthru
          _
      $region24: #{tpu_custom_call.1} parent=5 // pred_fallthru
        _
      %p248 = scmp.le.s32.totalorder 1, %s13
      %p249 = scmp.lt.s32.totalorder %s13, 3
      %p250 = pnand %p248, %p249
      %p251 = pneg %p250
      // Predicated region
      $region33: #{tpu_custom_call.1} parent=5 // pred_check
        _
      $region34: #{tpu_custom_call.1} parent=5 // pred_check_branch
        %253 = sbr.rel (%p250) target = $region36
      $region35: #{tpu_custom_call.1} parent=5 // pred_region
        %s254 = ssub.s32 %s13, 1
        %s255 = smul.u32 16, %s24
        %s256 = ssub.s32 18, %s255
        %p257 = scmp.lt.s32.totalorder %s256, 16
        %s258 = scalar_select %p257, %s256, 16
        %s259 = smul.u32 4, %s258
        %s260 = smul.u32 %s259, 3
        %p261 = scmp.lt.s32.totalorder %s23, 1
        %s262 = scalar_select %p261, %s23, 1
        %p263 = scmp.lt.s32.totalorder %s255, 17
        %s264 = scalar_select %p263, %s255, 17
        %s265 = smul.addr %s264, 3
        %s266 = smul.addr %s262, 54
        %s267 = sadd.s32 %s265, %s266
        %s268 = smul.addr %s267, 4
        %s269 = scalar_lea.vmem %s0, %s268
        %p270 = pneg %p60
        %p271 = pneg %p57
        %s272 = sadd.s32 %s24, 1
        %s273 = smul.u32 %s272, 8
        %s274 = smul.u32 2, %s273
        %p275 = scmp.lt.s32.totalorder %s23, 1
        %s276 = scalar_select %p275, %s23, 1
        %p277 = scmp.lt.s32.totalorder %s274, 17
        %s278 = scalar_select %p277, %s274, 17
        %s279 = smul.addr %s278, 3
        %s280 = smul.addr %s276, 54
        %s281 = sadd.s32 %s279, %s280
        %s282 = smul.addr %s281, 4
        %s283 = scalar_lea.vmem %s1, %s282
        %p284 = pneg %p92
        %p285 = pneg %p89
        %p286 = scmp.lt.s32.totalorder %s25, 0
        %s287 = scalar_select %p286, %s25, 0
        %s288 = smul.addr %s287, 4
        %s289 = scalar_lea.vmem %s2, %s288
        %p290 = pneg %p118
        %p291 = pneg %p115
        %p292 = scmp.lt.s32.totalorder %s25, 0
        %s293 = scalar_select %p292, %s25, 0
        %s294 = scalar_lea.vmem %s3, %s293
        %p295 = pneg %p144
        %p296 = pneg %p141
        %p297 = pneg %p174
        %p298 = pneg %p171
        %s299 = sand.u32 %s161, 1
        %s300 = scalar_lea.sflag [#allocation3], %s299
        %s301 = sand.u32 %s161, 1
        %s302 = smul.addr %s301, 128
        %s303 = scalar_lea.vmem [#allocation2], %s302
        %s304 = smul.u32 16, %s24
        %s305 = ssub.s32 18, %s304
        %p306 = scmp.lt.s32.totalorder %s305, 16
        %s307 = scalar_select %p306, %s305, 16
        %s308 = smul.u32 4, %s307
        %s309 = smul.u32 %s308, 3
        %p310 = scmp.lt.s32.totalorder %s23, 1
        %s311 = scalar_select %p310, %s23, 1
        %p312 = scmp.lt.s32.totalorder %s304, 17
        %s313 = scalar_select %p312, %s304, 17
        %s314 = smul.addr %s313, 3
        %s315 = smul.addr %s311, 54
        %s316 = sadd.s32 %s314, %s315
        %s317 = smul.addr %s316, 4
        %s318 = scalar_lea.vmem %s0, %s317
        %s319 = smul.u32 16, %s24
        %s320 = ssub.s32 18, %s319
        %p321 = scmp.lt.s32.totalorder %s320, 16
        %s322 = scalar_select %p321, %s320, 16
        %s323 = smul.u32 4, %s322
        %s324 = smul.u32 %s323, 3
        %s325 = sadd.s32 %s24, 1
        %s326 = smul.u32 %s325, 8
        %s327 = smul.u32 2, %s326
        %p328 = scmp.lt.s32.totalorder %s23, 1
        %s329 = scalar_select %p328, %s23, 1
        %p330 = scmp.lt.s32.totalorder %s327, 17
        %s331 = scalar_select %p330, %s327, 17
        %s332 = smul.addr %s331, 3
        %s333 = smul.addr %s329, 54
        %s334 = sadd.s32 %s332, %s333
        %s335 = smul.addr %s334, 4
        %s336 = scalar_lea.vmem %s1, %s335
        %s337 = sadd.s32 %s24, 1
        %s338 = smul.u32 %s337, 8
        %s339 = smul.u32 2, %s338
        %p340 = scmp.lt.s32.totalorder %s25, 0
        %s341 = scalar_select %p340, %s25, 0
        %s342 = smul.addr %s341, 4
        %s343 = scalar_lea.vmem %s2, %s342
        %p344 = scmp.lt.s32.totalorder %s25, 0
        %s345 = scalar_select %p344, %s25, 0
        %s346 = scalar_lea.vmem %s3, %s345
        %s347 = smul.u32 16, %s24
        %v349 = vld [vmem:[%s318] sm:$0xf]
        %v350 = vld [vmem:[%s318 + $0x4] sm:$0xf]
        %v351 = vld [vmem:[%s318 + $0x8] sm:$0x1]
        %v352 = vld [vmem:[%s318 + $0xc] sm:$0xf]
        %v353 = vld [vmem:[%s318 + $0x10] sm:$0xf]
        %v354 = vld [vmem:[%s318 + $0x14] sm:$0x1]
        %v355 = vld [vmem:[%s318 + $0x18] sm:$0xf]
        %v356 = vld [vmem:[%s318 + $0x1c] sm:$0xf]
        %v357 = vld [vmem:[%s318 + $0x20] sm:$0x1]
        %v358 = vld [vmem:[%s318 + $0x24] sm:$0xf]
        %v359 = vld [vmem:[%s318 + $0x28] sm:$0xf]
        %v360 = vld [vmem:[%s318 + $0x2c] sm:$0x1]
        %v361 = vld [vmem:[%s318 + $0x30] sm:$0xf]
        %v362 = vld [vmem:[%s318 + $0x34] sm:$0xf]
        %v363 = vld [vmem:[%s318 + $0x38] sm:$0x1]
        %v364 = vld [vmem:[%s318 + $0x3c] sm:$0xf]
        %v365 = vld [vmem:[%s318 + $0x40] sm:$0xf]
        %v366 = vld [vmem:[%s318 + $0x44] sm:$0x1]
        %v367 = vld [vmem:[%s318 + $0x48] sm:$0xf]
        %v368 = vld [vmem:[%s318 + $0x4c] sm:$0xf]
        %v369 = vld [vmem:[%s318 + $0x50] sm:$0x1]
        %v370 = vld [vmem:[%s318 + $0x54] sm:$0xf]
        %v371 = vld [vmem:[%s318 + $0x58] sm:$0xf]
        %v372 = vld [vmem:[%s318 + $0x5c] sm:$0x1]
        %v373 = vld [vmem:[%s318 + $0x60] sm:$0xf]
        %v374 = vld [vmem:[%s318 + $0x64] sm:$0xf]
        %v375 = vld [vmem:[%s318 + $0x68] sm:$0x1]
        %v376 = vld [vmem:[%s318 + $0x6c] sm:$0xf]
        %v377 = vld [vmem:[%s318 + $0x70] sm:$0xf]
        %v378 = vld [vmem:[%s318 + $0x74] sm:$0x1]
        %v379 = vld [vmem:[%s318 + $0x78] sm:$0xf]
        %v380 = vld [vmem:[%s318 + $0x7c] sm:$0xf]
        %v381 = vld [vmem:[%s318 + $0x80] sm:$0x1]
        %v382 = vld [vmem:[%s318 + $0x84] sm:$0xf]
        %v383 = vld [vmem:[%s318 + $0x88] sm:$0xf]
        %v384 = vld [vmem:[%s318 + $0x8c] sm:$0x1]
        %v385 = vld [vmem:[%s318 + $0x90] sm:$0xf]
        %v386 = vld [vmem:[%s318 + $0x94] sm:$0xf]
        %v387 = vld [vmem:[%s318 + $0x98] sm:$0x1]
        %v388 = vld [vmem:[%s318 + $0x9c] sm:$0xf]
        %v389 = vld [vmem:[%s318 + $0xa0] sm:$0xf]
        %v390 = vld [vmem:[%s318 + $0xa4] sm:$0x1]
        %v391 = vld [vmem:[%s318 + $0xa8] sm:$0xf]
        %v392 = vld [vmem:[%s318 + $0xac] sm:$0xf]
        %v393 = vld [vmem:[%s318 + $0xb0] sm:$0x1]
        %v394 = vld [vmem:[%s318 + $0xb4] sm:$0xf]
        %v395 = vld [vmem:[%s318 + $0xb8] sm:$0xf]
        %v396 = vld [vmem:[%s318 + $0xbc] sm:$0x1]
        %v397 = vld [vmem:[%s336] sm:$0xf]
        %v398 = vld [vmem:[%s336 + $0x4] sm:$0xf]
        %v399 = vld [vmem:[%s336 + $0x8] sm:$0x1]
        %v400 = vld [vmem:[%s336 + $0xc] sm:$0xf]
        %v401 = vld [vmem:[%s336 + $0x10] sm:$0xf]
        %v402 = vld [vmem:[%s336 + $0x14] sm:$0x1]
        %v435 = vunpack.c.l.b16 %v349
        %v436 = vunpack.c.l.b16 %v350
        %v437 = vunpack.c.l.b16 %v352
        %v438 = vunpack.c.l.b16 %v353
        %v439 = vunpack.c.l.b16 %v355
        %v440 = vunpack.c.l.b16 %v356
        %v441 = vunpack.c.l.b16 %v358
        %v442 = vunpack.c.l.b16 %v359
        %v443 = vunpack.c.l.b16 %v361
        %v444 = vunpack.c.l.b16 %v362
        %v445 = vunpack.c.l.b16 %v364
        %v446 = vunpack.c.l.b16 %v365
        %v447 = vunpack.c.l.b16 %v367
        %v448 = vunpack.c.l.b16 %v368
        %v449 = vunpack.c.l.b16 %v370
        %v450 = vunpack.c.l.b16 %v371
        %v451 = vunpack.c.l.b16 %v373
        %v452 = vunpack.c.l.b16 %v374
        %v453 = vunpack.c.l.b16 %v376
        %v454 = vunpack.c.l.b16 %v377
        %v455 = vunpack.c.l.b16 %v379
        %v456 = vunpack.c.l.b16 %v380
        %v457 = vunpack.c.l.b16 %v382
        %v458 = vunpack.c.l.b16 %v383
        %v459 = vunpack.c.l.b16 %v385
        %v460 = vunpack.c.l.b16 %v386
        %v461 = vunpack.c.l.b16 %v388
        %v462 = vunpack.c.l.b16 %v389
        %v463 = vunpack.c.l.b16 %v391
        %v464 = vunpack.c.l.b16 %v392
        %v465 = vunpack.c.l.b16 %v394
        %v466 = vunpack.c.l.b16 %v395
        %v467 = vpack.c.b16 %v436, %v435
        %v468 = vpack.c.b16 %v438, %v437
        %v469 = vpack.c.b16 %v440, %v439
        %v470 = vpack.c.b16 %v442, %v441
        %v471 = vpack.c.b16 %v444, %v443
        %v472 = vpack.c.b16 %v446, %v445
        %v473 = vpack.c.b16 %v448, %v447
        %v474 = vpack.c.b16 %v450, %v449
        %v475 = vpack.c.b16 %v452, %v451
        %v476 = vpack.c.b16 %v454, %v453
        %v477 = vpack.c.b16 %v456, %v455
        %v478 = vpack.c.b16 %v458, %v457
        %v479 = vpack.c.b16 %v460, %v459
        %v480 = vpack.c.b16 %v462, %v461
        %v481 = vpack.c.b16 %v464, %v463
        %v482 = vpack.c.b16 %v466, %v465
        %v499 = vunpack.c.l.b16 %v351
        %v500 = vunpack.c.l.b16 %v354
        %v501 = vunpack.c.l.b16 %v357
        %v502 = vunpack.c.l.b16 %v360
        %v503 = vunpack.c.l.b16 %v363
        %v504 = vunpack.c.l.b16 %v366
        %v505 = vunpack.c.l.b16 %v369
        %v506 = vunpack.c.l.b16 %v372
        %v507 = vunpack.c.l.b16 %v375
        %v508 = vunpack.c.l.b16 %v378
        %v509 = vunpack.c.l.b16 %v381
        %v510 = vunpack.c.l.b16 %v384
        %v511 = vunpack.c.l.b16 %v387
        %v512 = vunpack.c.l.b16 %v390
        %v513 = vunpack.c.l.b16 %v393
        %v514 = vunpack.c.l.b16 %v396
        %v515 = vpack.c.b16 %v499, %v499
        %v516 = vpack.c.b16 %v500, %v500
        %v517 = vpack.c.b16 %v501, %v501
        %v518 = vpack.c.b16 %v502, %v502
        %v519 = vpack.c.b16 %v503, %v503
        %v520 = vpack.c.b16 %v504, %v504
        %v521 = vpack.c.b16 %v505, %v505
        %v522 = vpack.c.b16 %v506, %v506
        %v523 = vpack.c.b16 %v507, %v507
        %v524 = vpack.c.b16 %v508, %v508
        %v525 = vpack.c.b16 %v509, %v509
        %v526 = vpack.c.b16 %v510, %v510
        %v527 = vpack.c.b16 %v511, %v511
        %v528 = vpack.c.b16 %v512, %v512
        %v529 = vpack.c.b16 %v513, %v513
        %v530 = vpack.c.b16 %v514, %v514
        %vm531 = vsmask.f32 7424
        %v533 = vshrl.u32 %v467, 16
        %v535 = vshll.u32 %v467, 16
        %v537 = vrot.slane %v535, 1
        %v538 = vor.u32 %v533, %v537
        %v540 = vshll.u32 %v515, 16
        %v542 = vrot.slane %v540, 1
        %v543 = vsel %vm531, %v538, %v542
        %v545 = vshrl.u32 %v468, 16
        %v547 = vshll.u32 %v468, 16
        %v549 = vrot.slane %v547, 1
        %v550 = vor.u32 %v545, %v549
        %v552 = vshll.u32 %v516, 16
        %v554 = vrot.slane %v552, 1
        %v555 = vsel %vm531, %v550, %v554
        %v557 = vshrl.u32 %v469, 16
        %v559 = vshll.u32 %v469, 16
        %v561 = vrot.slane %v559, 1
        %v562 = vor.u32 %v557, %v561
        %v564 = vshll.u32 %v517, 16
        %v566 = vrot.slane %v564, 1
        %v567 = vsel %vm531, %v562, %v566
        %v569 = vshrl.u32 %v470, 16
        %v571 = vshll.u32 %v470, 16
        %v573 = vrot.slane %v571, 1
        %v574 = vor.u32 %v569, %v573
        %v576 = vshll.u32 %v518, 16
        %v578 = vrot.slane %v576, 1
        %v579 = vsel %vm531, %v574, %v578
        %v581 = vshrl.u32 %v471, 16
        %v583 = vshll.u32 %v471, 16
        %v585 = vrot.slane %v583, 1
        %v586 = vor.u32 %v581, %v585
        %v588 = vshll.u32 %v519, 16
        %v590 = vrot.slane %v588, 1
        %v591 = vsel %vm531, %v586, %v590
        %v593 = vshrl.u32 %v472, 16
        %v595 = vshll.u32 %v472, 16
        %v597 = vrot.slane %v595, 1
        %v598 = vor.u32 %v593, %v597
        %v600 = vshll.u32 %v520, 16
        %v602 = vrot.slane %v600, 1
        %v603 = vsel %vm531, %v598, %v602
        %v605 = vshrl.u32 %v473, 16
        %v607 = vshll.u32 %v473, 16
        %v609 = vrot.slane %v607, 1
        %v610 = vor.u32 %v605, %v609
        %v612 = vshll.u32 %v521, 16
        %v614 = vrot.slane %v612, 1
        %v615 = vsel %vm531, %v610, %v614
        %v617 = vshrl.u32 %v474, 16
        %v619 = vshll.u32 %v474, 16
        %v621 = vrot.slane %v619, 1
        %v622 = vor.u32 %v617, %v621
        %v624 = vshll.u32 %v522, 16
        %v626 = vrot.slane %v624, 1
        %v627 = vsel %vm531, %v622, %v626
        %v629 = vshrl.u32 %v475, 16
        %v631 = vshll.u32 %v475, 16
        %v633 = vrot.slane %v631, 1
        %v634 = vor.u32 %v629, %v633
        %v636 = vshll.u32 %v523, 16
        %v638 = vrot.slane %v636, 1
        %v639 = vsel %vm531, %v634, %v638
        %v641 = vshrl.u32 %v476, 16
        %v643 = vshll.u32 %v476, 16
        %v645 = vrot.slane %v643, 1
        %v646 = vor.u32 %v641, %v645
        %v648 = vshll.u32 %v524, 16
        %v650 = vrot.slane %v648, 1
        %v651 = vsel %vm531, %v646, %v650
        %v653 = vshrl.u32 %v477, 16
        %v655 = vshll.u32 %v477, 16
        %v657 = vrot.slane %v655, 1
        %v658 = vor.u32 %v653, %v657
        %v660 = vshll.u32 %v525, 16
        %v662 = vrot.slane %v660, 1
        %v663 = vsel %vm531, %v658, %v662
        %v665 = vshrl.u32 %v478, 16
        %v667 = vshll.u32 %v478, 16
        %v669 = vrot.slane %v667, 1
        %v670 = vor.u32 %v665, %v669
        %v672 = vshll.u32 %v526, 16
        %v674 = vrot.slane %v672, 1
        %v675 = vsel %vm531, %v670, %v674
        %v677 = vshrl.u32 %v479, 16
        %v679 = vshll.u32 %v479, 16
        %v681 = vrot.slane %v679, 1
        %v682 = vor.u32 %v677, %v681
        %v684 = vshll.u32 %v527, 16
        %v686 = vrot.slane %v684, 1
        %v687 = vsel %vm531, %v682, %v686
        %v689 = vshrl.u32 %v480, 16
        %v691 = vshll.u32 %v480, 16
        %v693 = vrot.slane %v691, 1
        %v694 = vor.u32 %v689, %v693
        %v696 = vshll.u32 %v528, 16
        %v698 = vrot.slane %v696, 1
        %v699 = vsel %vm531, %v694, %v698
        %v701 = vshrl.u32 %v481, 16
        %v703 = vshll.u32 %v481, 16
        %v705 = vrot.slane %v703, 1
        %v706 = vor.u32 %v701, %v705
        %v708 = vshll.u32 %v529, 16
        %v710 = vrot.slane %v708, 1
        %v711 = vsel %vm531, %v706, %v710
        %v713 = vshrl.u32 %v482, 16
        %v715 = vshll.u32 %v482, 16
        %v717 = vrot.slane %v715, 1
        %v718 = vor.u32 %v713, %v717
        %v720 = vshll.u32 %v530, 16
        %v722 = vrot.slane %v720, 1
        %v723 = vsel %vm531, %v718, %v722
        %724 = vrot.lane.b32.xlu0 %v543, 3
        %v725 = vpop.permute.xlu0 %724
        %726 = vrot.lane.b32.xlu0 %v555, 3
        %v727 = vpop.permute.xlu0 %726
        %728 = vrot.lane.b32.xlu0 %v567, 3
        %v729 = vpop.permute.xlu0 %728
        %730 = vrot.lane.b32.xlu0 %v579, 3
        %v731 = vpop.permute.xlu0 %730
        %732 = vrot.lane.b32.xlu0 %v591, 3
        %v733 = vpop.permute.xlu0 %732
        %734 = vrot.lane.b32.xlu0 %v603, 3
        %v735 = vpop.permute.xlu0 %734
        %736 = vrot.lane.b32.xlu0 %v615, 3
        %v737 = vpop.permute.xlu0 %736
        %738 = vrot.lane.b32.xlu0 %v627, 3
        %v739 = vpop.permute.xlu0 %738
        %740 = vrot.lane.b32.xlu0 %v639, 3
        %v741 = vpop.permute.xlu0 %740
        %742 = vrot.lane.b32.xlu0 %v651, 3
        %v743 = vpop.permute.xlu0 %742
        %744 = vrot.lane.b32.xlu0 %v663, 3
        %v745 = vpop.permute.xlu0 %744
        %746 = vrot.lane.b32.xlu0 %v675, 3
        %v747 = vpop.permute.xlu0 %746
        %748 = vrot.lane.b32.xlu0 %v687, 3
        %v749 = vpop.permute.xlu0 %748
        %750 = vrot.lane.b32.xlu0 %v699, 3
        %v751 = vpop.permute.xlu0 %750
        %752 = vrot.lane.b32.xlu0 %v711, 3
        %v753 = vpop.permute.xlu0 %752
        %754 = vrot.lane.b32.xlu0 %v723, 3
        %v755 = vpop.permute.xlu0 %754
        %vm756 = vcmask 1046528
        %v757 = vrot.slane %v467, 1
        %v758 = vrot.slane %v515, 1
        %v759 = vsel %vm756, %v757, %v758
        %v760 = vrot.slane %v468, 1
        %v761 = vrot.slane %v516, 1
        %v762 = vsel %vm756, %v760, %v761
        %v763 = vrot.slane %v469, 1
        %v764 = vrot.slane %v517, 1
        %v765 = vsel %vm756, %v763, %v764
        %v766 = vrot.slane %v470, 1
        %v767 = vrot.slane %v518, 1
        %v768 = vsel %vm756, %v766, %v767
        %v769 = vrot.slane %v471, 1
        %v770 = vrot.slane %v519, 1
        %v771 = vsel %vm756, %v769, %v770
        %v772 = vrot.slane %v472, 1
        %v773 = vrot.slane %v520, 1
        %v774 = vsel %vm756, %v772, %v773
        %v775 = vrot.slane %v473, 1
        %v776 = vrot.slane %v521, 1
        %v777 = vsel %vm756, %v775, %v776
        %v778 = vrot.slane %v474, 1
        %v779 = vrot.slane %v522, 1
        %v780 = vsel %vm756, %v778, %v779
        %v781 = vrot.slane %v475, 1
        %v782 = vrot.slane %v523, 1
        %v783 = vsel %vm756, %v781, %v782
        %v784 = vrot.slane %v476, 1
        %v785 = vrot.slane %v524, 1
        %v786 = vsel %vm756, %v784, %v785
        %v787 = vrot.slane %v477, 1
        %v788 = vrot.slane %v525, 1
        %v789 = vsel %vm756, %v787, %v788
        %v790 = vrot.slane %v478, 1
        %v791 = vrot.slane %v526, 1
        %v792 = vsel %vm756, %v790, %v791
        %v793 = vrot.slane %v479, 1
        %v794 = vrot.slane %v527, 1
        %v795 = vsel %vm756, %v793, %v794
        %v796 = vrot.slane %v480, 1
        %v797 = vrot.slane %v528, 1
        %v798 = vsel %vm756, %v796, %v797
        %v799 = vrot.slane %v481, 1
        %v800 = vrot.slane %v529, 1
        %v801 = vsel %vm756, %v799, %v800
        %v802 = vrot.slane %v482, 1
        %v803 = vrot.slane %v530, 1
        %v804 = vsel %vm756, %v802, %v803
        %805 = vrot.lane.b32.xlu0 %v759, 6
        %v806 = vpop.permute.xlu0 %805
        %807 = vrot.lane.b32.xlu0 %v762, 6
        %v808 = vpop.permute.xlu0 %807
        %809 = vrot.lane.b32.xlu0 %v765, 6
        %v810 = vpop.permute.xlu0 %809
        %811 = vrot.lane.b32.xlu0 %v768, 6
        %v812 = vpop.permute.xlu0 %811
        %813 = vrot.lane.b32.xlu0 %v771, 6
        %v814 = vpop.permute.xlu0 %813
        %815 = vrot.lane.b32.xlu0 %v774, 6
        %v816 = vpop.permute.xlu0 %815
        %817 = vrot.lane.b32.xlu0 %v777, 6
        %v818 = vpop.permute.xlu0 %817
        %819 = vrot.lane.b32.xlu0 %v780, 6
        %v820 = vpop.permute.xlu0 %819
        %821 = vrot.lane.b32.xlu0 %v783, 6
        %v822 = vpop.permute.xlu0 %821
        %823 = vrot.lane.b32.xlu0 %v786, 6
        %v824 = vpop.permute.xlu0 %823
        %825 = vrot.lane.b32.xlu0 %v789, 6
        %v826 = vpop.permute.xlu0 %825
        %827 = vrot.lane.b32.xlu0 %v792, 6
        %v828 = vpop.permute.xlu0 %827
        %829 = vrot.lane.b32.xlu0 %v795, 6
        %v830 = vpop.permute.xlu0 %829
        %831 = vrot.lane.b32.xlu0 %v798, 6
        %v832 = vpop.permute.xlu0 %831
        %833 = vrot.lane.b32.xlu0 %v801, 6
        %v834 = vpop.permute.xlu0 %833
        %835 = vrot.lane.b32.xlu0 %v804, 6
        %v836 = vpop.permute.xlu0 %835
        %vm837 = vcmask 23552
        %v839 = vsel %vm837, %v467, %v725
        %v841 = vsel %vm837, %v468, %v727
        %v843 = vsel %vm837, %v469, %v729
        %v845 = vsel %vm837, %v470, %v731
        %v847 = vsel %vm837, %v471, %v733
        %v849 = vsel %vm837, %v472, %v735
        %v851 = vsel %vm837, %v473, %v737
        %v853 = vsel %vm837, %v474, %v739
        %v855 = vsel %vm837, %v475, %v741
        %v857 = vsel %vm837, %v476, %v743
        %v859 = vsel %vm837, %v477, %v745
        %v861 = vsel %vm837, %v478, %v747
        %v863 = vsel %vm837, %v479, %v749
        %v865 = vsel %vm837, %v480, %v751
        %v867 = vsel %vm837, %v481, %v753
        %v869 = vsel %vm837, %v482, %v755
        %vm870 = vcmask 48128
        %v872 = vsel %vm870, %v839, %v806
        %v874 = vsel %vm870, %v841, %v808
        %v876 = vsel %vm870, %v843, %v810
        %v878 = vsel %vm870, %v845, %v812
        %v880 = vsel %vm870, %v847, %v814
        %v882 = vsel %vm870, %v849, %v816
        %v884 = vsel %vm870, %v851, %v818
        %v886 = vsel %vm870, %v853, %v820
        %v888 = vsel %vm870, %v855, %v822
        %v890 = vsel %vm870, %v857, %v824
        %v892 = vsel %vm870, %v859, %v826
        %v894 = vsel %vm870, %v861, %v828
        %v896 = vsel %vm870, %v863, %v830
        %v898 = vsel %vm870, %v865, %v832
        %v900 = vsel %vm870, %v867, %v834
        %v902 = vsel %vm870, %v869, %v836
        %v903 = vld [vmem:[%s343] sm:$0xf]
        %v904 = vld [vmem:[%s343 + $0x4] sm:$0x1]
        %v907 = vunpack.c.l.b16 %v903
        %v908 = vunpack.c.l.b16 %v904
        %v909 = vpack.c.b16 %v908, %v907
        %vm910 = vcmask 72704
        %v911 = vsel %vm910, %v872, 0
        %v913 = vsel %vm910, %v874, 0
        %v915 = vsel %vm910, %v876, 0
        %v917 = vsel %vm910, %v878, 0
        %v919 = vsel %vm910, %v880, 0
        %v921 = vsel %vm910, %v882, 0
        %v923 = vsel %vm910, %v884, 0
        %v925 = vsel %vm910, %v886, 0
        %v927 = vsel %vm910, %v888, 0
        %v929 = vsel %vm910, %v890, 0
        %v931 = vsel %vm910, %v892, 0
        %v933 = vsel %vm910, %v894, 0
        %v935 = vsel %vm910, %v896, 0
        %v937 = vsel %vm910, %v898, 0
        %v939 = vsel %vm910, %v900, 0
        %v941 = vsel %vm910, %v902, 0
        %vm943 = vcmask 1043456
        %vm944 = vcmask 1044480
        %v945 = vsel %vm943, 4294967295, 65535
        %v946 = vsel %vm944, %v945, 0
        %v948 = vand.u32 %v909, %v946
        %950 = vmatpush.bf16.msra.mxu0 0
        %951 = vmatpush.bf16.msra.mxu0 0
        %952 = vmatpush.bf16.msra.mxu0 0
        %953 = vmatpush.bf16.msra.mxu0 0
        %954 = vmatpush.bf16.msra.mxu0 0
        %955 = vmatpush.bf16.msra.mxu0 0
        %956 = vmatpush.bf16.msra.mxu0 0
        %957 = vmatpush.bf16.msra.mxu0 %v948
        %958 = vmatmul.bf16.gmra.mxu0 %v911
        %v959 = vpop.f32.mrf.mxu0
        %v960 = vadd.f32 0.0, %v959
        %v961 = vpop.f32.mrf.mxu0
        %v962 = vadd.f32 0.0, %v961
        %963 = vmatmul.bf16.gmra.mxu0 %v913
        %v964 = vpop.f32.mrf.mxu0
        %v965 = vadd.f32 0.0, %v964
        %v966 = vpop.f32.mrf.mxu0
        %v967 = vadd.f32 0.0, %v966
        %968 = vmatmul.bf16.gmra.mxu0 %v915
        %v969 = vpop.f32.mrf.mxu0
        %v970 = vadd.f32 0.0, %v969
        %v971 = vpop.f32.mrf.mxu0
        %v972 = vadd.f32 0.0, %v971
        %973 = vmatmul.bf16.gmra.mxu0 %v917
        %v974 = vpop.f32.mrf.mxu0
        %v975 = vadd.f32 0.0, %v974
        %v976 = vpop.f32.mrf.mxu0
        %v977 = vadd.f32 0.0, %v976
        %978 = vmatmul.bf16.gmra.mxu0 %v919
        %v979 = vpop.f32.mrf.mxu0
        %v980 = vadd.f32 0.0, %v979
        %v981 = vpop.f32.mrf.mxu0
        %v982 = vadd.f32 0.0, %v981
        %983 = vmatmul.bf16.gmra.mxu0 %v921
        %v984 = vpop.f32.mrf.mxu0
        %v985 = vadd.f32 0.0, %v984
        %v986 = vpop.f32.mrf.mxu0
        %v987 = vadd.f32 0.0, %v986
        %988 = vmatmul.bf16.gmra.mxu0 %v923
        %v989 = vpop.f32.mrf.mxu0
        %v990 = vadd.f32 0.0, %v989
        %v991 = vpop.f32.mrf.mxu0
        %v992 = vadd.f32 0.0, %v991
        %993 = vmatmul.bf16.gmra.mxu0 %v925
        %v994 = vpop.f32.mrf.mxu0
        %v995 = vadd.f32 0.0, %v994
        %v996 = vpop.f32.mrf.mxu0
        %v997 = vadd.f32 0.0, %v996
        %998 = vmatmul.bf16.gmra.mxu0 %v927
        %v999 = vpop.f32.mrf.mxu0
        %v1000 = vadd.f32 0.0, %v999
        %v1001 = vpop.f32.mrf.mxu0
        %v1002 = vadd.f32 0.0, %v1001
        %1003 = vmatmul.bf16.gmra.mxu0 %v929
        %v1004 = vpop.f32.mrf.mxu0
        %v1005 = vadd.f32 0.0, %v1004
        %v1006 = vpop.f32.mrf.mxu0
        %v1007 = vadd.f32 0.0, %v1006
        %1008 = vmatmul.bf16.gmra.mxu0 %v931
        %v1009 = vpop.f32.mrf.mxu0
        %v1010 = vadd.f32 0.0, %v1009
        %v1011 = vpop.f32.mrf.mxu0
        %v1012 = vadd.f32 0.0, %v1011
        %1013 = vmatmul.bf16.gmra.mxu0 %v933
        %v1014 = vpop.f32.mrf.mxu0
        %v1015 = vadd.f32 0.0, %v1014
        %v1016 = vpop.f32.mrf.mxu0
        %v1017 = vadd.f32 0.0, %v1016
        %1018 = vmatmul.bf16.gmra.mxu0 %v935
        %v1019 = vpop.f32.mrf.mxu0
        %v1020 = vadd.f32 0.0, %v1019
        %v1021 = vpop.f32.mrf.mxu0
        %v1022 = vadd.f32 0.0, %v1021
        %1023 = vmatmul.bf16.gmra.mxu0 %v937
        %v1024 = vpop.f32.mrf.mxu0
        %v1025 = vadd.f32 0.0, %v1024
        %v1026 = vpop.f32.mrf.mxu0
        %v1027 = vadd.f32 0.0, %v1026
        %1028 = vmatmul.bf16.gmra.mxu0 %v939
        %v1029 = vpop.f32.mrf.mxu0
        %v1030 = vadd.f32 0.0, %v1029
        %v1031 = vpop.f32.mrf.mxu0
        %v1032 = vadd.f32 0.0, %v1031
        %1033 = vmatmul.bf16.gmra.mxu0 %v941
        %v1034 = vpop.f32.mrf.mxu0
        %v1035 = vadd.f32 0.0, %v1034
        %v1036 = vpop.f32.mrf.mxu0
        %v1037 = vadd.f32 0.0, %v1036
        %1038 = vdwg.mxu0
        %v1039 = vadd.f32 %v960, 0.0
        %v1040 = vadd.f32 %v962, 0.0
        %v1041 = vadd.f32 %v965, 0.0
        %v1042 = vadd.f32 %v967, 0.0
        %v1043 = vadd.f32 %v970, 0.0
        %v1044 = vadd.f32 %v972, 0.0
        %v1045 = vadd.f32 %v975, 0.0
        %v1046 = vadd.f32 %v977, 0.0
        %v1047 = vadd.f32 %v980, 0.0
        %v1048 = vadd.f32 %v982, 0.0
        %v1049 = vadd.f32 %v985, 0.0
        %v1050 = vadd.f32 %v987, 0.0
        %v1051 = vadd.f32 %v990, 0.0
        %v1052 = vadd.f32 %v992, 0.0
        %v1053 = vadd.f32 %v995, 0.0
        %v1054 = vadd.f32 %v997, 0.0
        %v1055 = vadd.f32 %v1000, 0.0
        %v1056 = vadd.f32 %v1002, 0.0
        %v1057 = vadd.f32 %v1005, 0.0
        %v1058 = vadd.f32 %v1007, 0.0
        %v1059 = vadd.f32 %v1010, 0.0
        %v1060 = vadd.f32 %v1012, 0.0
        %v1061 = vadd.f32 %v1015, 0.0
        %v1062 = vadd.f32 %v1017, 0.0
        %v1063 = vadd.f32 %v1020, 0.0
        %v1064 = vadd.f32 %v1022, 0.0
        %v1065 = vadd.f32 %v1025, 0.0
        %v1066 = vadd.f32 %v1027, 0.0
        %v1067 = vadd.f32 %v1030, 0.0
        %v1068 = vadd.f32 %v1032, 0.0
        %v1069 = vadd.f32 %v1035, 0.0
        %v1070 = vadd.f32 %v1037, 0.0
        %v1073 = vunpack.c.l.b16 %v397
        %v1074 = vunpack.c.l.b16 %v398
        %v1075 = vpack.c.b16 %v1074, %v1073
        %v1077 = vunpack.c.l.b16 %v399
        %v1078 = vpack.c.b16 %v1077, %v1077
        %v1080 = vshrl.u32 %v1075, 16
        %v1082 = vshll.u32 %v1075, 16
        %v1084 = vrot.slane %v1082, 1
        %v1085 = vor.u32 %v1080, %v1084
        %v1087 = vshll.u32 %v1078, 16
        %v1089 = vrot.slane %v1087, 1
        %v1090 = vsel %vm531, %v1085, %v1089
        %1091 = vrot.lane.b32.xlu0 %v1090, 3
        %v1092 = vpop.permute.xlu0 %1091
        %v1093 = vrot.slane %v1075, 1
        %v1094 = vrot.slane %v1078, 1
        %v1095 = vsel %vm756, %v1093, %v1094
        %1096 = vrot.lane.b32.xlu0 %v1095, 6
        %v1097 = vpop.permute.xlu0 %1096
        %v1099 = vsel %vm837, %v1075, %v1092
        %v1101 = vsel %vm870, %v1099, %v1097
        %s1102 = scalar_lea.vmem %s343, 8
        %v1103 = vld [vmem:[%s1102] sm:$0xf]
        %v1104 = vld [vmem:[%s1102 + $0x4] sm:$0x1]
        %v1107 = vunpack.c.l.b16 %v1103
        %v1108 = vunpack.c.l.b16 %v1104
        %v1109 = vpack.c.b16 %v1108, %v1107
        %v1110 = vsel %vm910, %v1101, 0
        %v1113 = vand.u32 %v1109, %v946
        %1115 = vmatpush.bf16.msra.mxu0 0
        %1116 = vmatpush.bf16.msra.mxu0 0
        %1117 = vmatpush.bf16.msra.mxu0 0
        %1118 = vmatpush.bf16.msra.mxu0 0
        %1119 = vmatpush.bf16.msra.mxu0 0
        %1120 = vmatpush.bf16.msra.mxu0 0
        %1121 = vmatpush.bf16.msra.mxu0 0
        %1122 = vmatpush.bf16.msra.mxu0 %v1113
        %1123 = vmatmul.bf16.gmra.mxu0 %v913
        %v1124 = vpop.f32.mrf.mxu0
        %v1125 = vadd.f32 0.0, %v1124
        %v1126 = vpop.f32.mrf.mxu0
        %v1127 = vadd.f32 0.0, %v1126
        %1128 = vmatmul.bf16.gmra.mxu0 %v915
        %v1129 = vpop.f32.mrf.mxu0
        %v1130 = vadd.f32 0.0, %v1129
        %v1131 = vpop.f32.mrf.mxu0
        %v1132 = vadd.f32 0.0, %v1131
        %1133 = vmatmul.bf16.gmra.mxu0 %v917
        %v1134 = vpop.f32.mrf.mxu0
        %v1135 = vadd.f32 0.0, %v1134
        %v1136 = vpop.f32.mrf.mxu0
        %v1137 = vadd.f32 0.0, %v1136
        %1138 = vmatmul.bf16.gmra.mxu0 %v919
        %v1139 = vpop.f32.mrf.mxu0
        %v1140 = vadd.f32 0.0, %v1139
        %v1141 = vpop.f32.mrf.mxu0
        %v1142 = vadd.f32 0.0, %v1141
        %1143 = vmatmul.bf16.gmra.mxu0 %v921
        %v1144 = vpop.f32.mrf.mxu0
        %v1145 = vadd.f32 0.0, %v1144
        %v1146 = vpop.f32.mrf.mxu0
        %v1147 = vadd.f32 0.0, %v1146
        %1148 = vmatmul.bf16.gmra.mxu0 %v923
        %v1149 = vpop.f32.mrf.mxu0
        %v1150 = vadd.f32 0.0, %v1149
        %v1151 = vpop.f32.mrf.mxu0
        %v1152 = vadd.f32 0.0, %v1151
        %1153 = vmatmul.bf16.gmra.mxu0 %v925
        %v1154 = vpop.f32.mrf.mxu0
        %v1155 = vadd.f32 0.0, %v1154
        %v1156 = vpop.f32.mrf.mxu0
        %v1157 = vadd.f32 0.0, %v1156
        %1158 = vmatmul.bf16.gmra.mxu0 %v927
        %v1159 = vpop.f32.mrf.mxu0
        %v1160 = vadd.f32 0.0, %v1159
        %v1161 = vpop.f32.mrf.mxu0
        %v1162 = vadd.f32 0.0, %v1161
        %1163 = vmatmul.bf16.gmra.mxu0 %v929
        %v1164 = vpop.f32.mrf.mxu0
        %v1165 = vadd.f32 0.0, %v1164
        %v1166 = vpop.f32.mrf.mxu0
        %v1167 = vadd.f32 0.0, %v1166
        %1168 = vmatmul.bf16.gmra.mxu0 %v931
        %v1169 = vpop.f32.mrf.mxu0
        %v1170 = vadd.f32 0.0, %v1169
        %v1171 = vpop.f32.mrf.mxu0
        %v1172 = vadd.f32 0.0, %v1171
        %1173 = vmatmul.bf16.gmra.mxu0 %v933
        %v1174 = vpop.f32.mrf.mxu0
        %v1175 = vadd.f32 0.0, %v1174
        %v1176 = vpop.f32.mrf.mxu0
        %v1177 = vadd.f32 0.0, %v1176
        %1178 = vmatmul.bf16.gmra.mxu0 %v935
        %v1179 = vpop.f32.mrf.mxu0
        %v1180 = vadd.f32 0.0, %v1179
        %v1181 = vpop.f32.mrf.mxu0
        %v1182 = vadd.f32 0.0, %v1181
        %1183 = vmatmul.bf16.gmra.mxu0 %v937
        %v1184 = vpop.f32.mrf.mxu0
        %v1185 = vadd.f32 0.0, %v1184
        %v1186 = vpop.f32.mrf.mxu0
        %v1187 = vadd.f32 0.0, %v1186
        %1188 = vmatmul.bf16.gmra.mxu0 %v939
        %v1189 = vpop.f32.mrf.mxu0
        %v1190 = vadd.f32 0.0, %v1189
        %v1191 = vpop.f32.mrf.mxu0
        %v1192 = vadd.f32 0.0, %v1191
        %1193 = vmatmul.bf16.gmra.mxu0 %v941
        %v1194 = vpop.f32.mrf.mxu0
        %v1195 = vadd.f32 0.0, %v1194
        %v1196 = vpop.f32.mrf.mxu0
        %v1197 = vadd.f32 0.0, %v1196
        %1198 = vmatmul.bf16.gmra.mxu0 %v1110
        %v1199 = vpop.f32.mrf.mxu0
        %v1200 = vadd.f32 0.0, %v1199
        %v1201 = vpop.f32.mrf.mxu0
        %v1202 = vadd.f32 0.0, %v1201
        %1203 = vdwg.mxu0
        %v1204 = vadd.f32 %v1039, %v1125
        %v1205 = vadd.f32 %v1040, %v1127
        %v1206 = vadd.f32 %v1041, %v1130
        %v1207 = vadd.f32 %v1042, %v1132
        %v1208 = vadd.f32 %v1043, %v1135
        %v1209 = vadd.f32 %v1044, %v1137
        %v1210 = vadd.f32 %v1045, %v1140
        %v1211 = vadd.f32 %v1046, %v1142
        %v1212 = vadd.f32 %v1047, %v1145
        %v1213 = vadd.f32 %v1048, %v1147
        %v1214 = vadd.f32 %v1049, %v1150
        %v1215 = vadd.f32 %v1050, %v1152
        %v1216 = vadd.f32 %v1051, %v1155
        %v1217 = vadd.f32 %v1052, %v1157
        %v1218 = vadd.f32 %v1053, %v1160
        %v1219 = vadd.f32 %v1054, %v1162
        %v1220 = vadd.f32 %v1055, %v1165
        %v1221 = vadd.f32 %v1056, %v1167
        %v1222 = vadd.f32 %v1057, %v1170
        %v1223 = vadd.f32 %v1058, %v1172
        %v1224 = vadd.f32 %v1059, %v1175
        %v1225 = vadd.f32 %v1060, %v1177
        %v1226 = vadd.f32 %v1061, %v1180
        %v1227 = vadd.f32 %v1062, %v1182
        %v1228 = vadd.f32 %v1063, %v1185
        %v1229 = vadd.f32 %v1064, %v1187
        %v1230 = vadd.f32 %v1065, %v1190
        %v1231 = vadd.f32 %v1066, %v1192
        %v1232 = vadd.f32 %v1067, %v1195
        %v1233 = vadd.f32 %v1068, %v1197
        %v1234 = vadd.f32 %v1069, %v1200
        %v1235 = vadd.f32 %v1070, %v1202
        %v1238 = vunpack.c.l.b16 %v400
        %v1239 = vunpack.c.l.b16 %v401
        %v1240 = vpack.c.b16 %v1239, %v1238
        %v1242 = vunpack.c.l.b16 %v402
        %v1243 = vpack.c.b16 %v1242, %v1242
        %v1245 = vshrl.u32 %v1240, 16
        %v1247 = vshll.u32 %v1240, 16
        %v1249 = vrot.slane %v1247, 1
        %v1250 = vor.u32 %v1245, %v1249
        %v1252 = vshll.u32 %v1243, 16
        %v1254 = vrot.slane %v1252, 1
        %v1255 = vsel %vm531, %v1250, %v1254
        %1256 = vrot.lane.b32.xlu0 %v1255, 3
        %v1257 = vpop.permute.xlu0 %1256
        %v1258 = vrot.slane %v1240, 1
        %v1259 = vrot.slane %v1243, 1
        %v1260 = vsel %vm756, %v1258, %v1259
        %1261 = vrot.lane.b32.xlu0 %v1260, 6
        %v1262 = vpop.permute.xlu0 %1261
        %v1264 = vsel %vm837, %v1240, %v1257
        %v1266 = vsel %vm870, %v1264, %v1262
        %s1267 = scalar_lea.vmem %s343, 16
        %v1268 = vld [vmem:[%s1267] sm:$0xf]
        %v1269 = vld [vmem:[%s1267 + $0x4] sm:$0x1]
        %v1272 = vunpack.c.l.b16 %v1268
        %v1273 = vunpack.c.l.b16 %v1269
        %v1274 = vpack.c.b16 %v1273, %v1272
        %v1275 = vsel %vm910, %v1266, 0
        %v1278 = vand.u32 %v1274, %v946
        %1280 = vmatpush.bf16.msra.mxu0 0
        %1281 = vmatpush.bf16.msra.mxu0 0
        %1282 = vmatpush.bf16.msra.mxu0 0
        %1283 = vmatpush.bf16.msra.mxu0 0
        %1284 = vmatpush.bf16.msra.mxu0 0
        %1285 = vmatpush.bf16.msra.mxu0 0
        %1286 = vmatpush.bf16.msra.mxu0 0
        %1287 = vmatpush.bf16.msra.mxu0 %v1278
        %1288 = vmatmul.bf16.gmra.mxu0 %v915
        %v1289 = vpop.f32.mrf.mxu0
        %v1290 = vadd.f32 0.0, %v1289
        %v1291 = vpop.f32.mrf.mxu0
        %v1292 = vadd.f32 0.0, %v1291
        %1293 = vmatmul.bf16.gmra.mxu0 %v917
        %v1294 = vpop.f32.mrf.mxu0
        %v1295 = vadd.f32 0.0, %v1294
        %v1296 = vpop.f32.mrf.mxu0
        %v1297 = vadd.f32 0.0, %v1296
        %1298 = vmatmul.bf16.gmra.mxu0 %v919
        %v1299 = vpop.f32.mrf.mxu0
        %v1300 = vadd.f32 0.0, %v1299
        %v1301 = vpop.f32.mrf.mxu0
        %v1302 = vadd.f32 0.0, %v1301
        %1303 = vmatmul.bf16.gmra.mxu0 %v921
        %v1304 = vpop.f32.mrf.mxu0
        %v1305 = vadd.f32 0.0, %v1304
        %v1306 = vpop.f32.mrf.mxu0
        %v1307 = vadd.f32 0.0, %v1306
        %1308 = vmatmul.bf16.gmra.mxu0 %v923
        %v1309 = vpop.f32.mrf.mxu0
        %v1310 = vadd.f32 0.0, %v1309
        %v1311 = vpop.f32.mrf.mxu0
        %v1312 = vadd.f32 0.0, %v1311
        %1313 = vmatmul.bf16.gmra.mxu0 %v925
        %v1314 = vpop.f32.mrf.mxu0
        %v1315 = vadd.f32 0.0, %v1314
        %v1316 = vpop.f32.mrf.mxu0
        %v1317 = vadd.f32 0.0, %v1316
        %1318 = vmatmul.bf16.gmra.mxu0 %v927
        %v1319 = vpop.f32.mrf.mxu0
        %v1320 = vadd.f32 0.0, %v1319
        %v1321 = vpop.f32.mrf.mxu0
        %v1322 = vadd.f32 0.0, %v1321
        %1323 = vmatmul.bf16.gmra.mxu0 %v929
        %v1324 = vpop.f32.mrf.mxu0
        %v1325 = vadd.f32 0.0, %v1324
        %v1326 = vpop.f32.mrf.mxu0
        %v1327 = vadd.f32 0.0, %v1326
        %1328 = vmatmul.bf16.gmra.mxu0 %v931
        %v1329 = vpop.f32.mrf.mxu0
        %v1330 = vadd.f32 0.0, %v1329
        %v1331 = vpop.f32.mrf.mxu0
        %v1332 = vadd.f32 0.0, %v1331
        %1333 = vmatmul.bf16.gmra.mxu0 %v933
        %v1334 = vpop.f32.mrf.mxu0
        %v1335 = vadd.f32 0.0, %v1334
        %v1336 = vpop.f32.mrf.mxu0
        %v1337 = vadd.f32 0.0, %v1336
        %1338 = vmatmul.bf16.gmra.mxu0 %v935
        %v1339 = vpop.f32.mrf.mxu0
        %v1340 = vadd.f32 0.0, %v1339
        %v1341 = vpop.f32.mrf.mxu0
        %v1342 = vadd.f32 0.0, %v1341
        %1343 = vmatmul.bf16.gmra.mxu0 %v937
        %v1344 = vpop.f32.mrf.mxu0
        %v1345 = vadd.f32 0.0, %v1344
        %v1346 = vpop.f32.mrf.mxu0
        %v1347 = vadd.f32 0.0, %v1346
        %1348 = vmatmul.bf16.gmra.mxu0 %v939
        %v1349 = vpop.f32.mrf.mxu0
        %v1350 = vadd.f32 0.0, %v1349
        %v1351 = vpop.f32.mrf.mxu0
        %v1352 = vadd.f32 0.0, %v1351
        %1353 = vmatmul.bf16.gmra.mxu0 %v941
        %v1354 = vpop.f32.mrf.mxu0
        %v1355 = vadd.f32 0.0, %v1354
        %v1356 = vpop.f32.mrf.mxu0
        %v1357 = vadd.f32 0.0, %v1356
        %1358 = vmatmul.bf16.gmra.mxu0 %v1110
        %v1359 = vpop.f32.mrf.mxu0
        %v1360 = vadd.f32 0.0, %v1359
        %v1361 = vpop.f32.mrf.mxu0
        %v1362 = vadd.f32 0.0, %v1361
        %1363 = vmatmul.bf16.gmra.mxu0 %v1275
        %v1364 = vpop.f32.mrf.mxu0
        %v1365 = vadd.f32 0.0, %v1364
        %v1366 = vpop.f32.mrf.mxu0
        %v1367 = vadd.f32 0.0, %v1366
        %1368 = vdwg.mxu0
        %v1369 = vadd.f32 %v1204, %v1290
        %v1370 = vadd.f32 %v1205, %v1292
        %v1371 = vadd.f32 %v1206, %v1295
        %v1372 = vadd.f32 %v1207, %v1297
        %v1373 = vadd.f32 %v1208, %v1300
        %v1374 = vadd.f32 %v1209, %v1302
        %v1375 = vadd.f32 %v1210, %v1305
        %v1376 = vadd.f32 %v1211, %v1307
        %v1377 = vadd.f32 %v1212, %v1310
        %v1378 = vadd.f32 %v1213, %v1312
        %v1379 = vadd.f32 %v1214, %v1315
        %v1380 = vadd.f32 %v1215, %v1317
        %v1381 = vadd.f32 %v1216, %v1320
        %v1382 = vadd.f32 %v1217, %v1322
        %v1383 = vadd.f32 %v1218, %v1325
        %v1384 = vadd.f32 %v1219, %v1327
        %v1385 = vadd.f32 %v1220, %v1330
        %v1386 = vadd.f32 %v1221, %v1332
        %v1387 = vadd.f32 %v1222, %v1335
        %v1388 = vadd.f32 %v1223, %v1337
        %v1389 = vadd.f32 %v1224, %v1340
        %v1390 = vadd.f32 %v1225, %v1342
        %v1391 = vadd.f32 %v1226, %v1345
        %v1392 = vadd.f32 %v1227, %v1347
        %v1393 = vadd.f32 %v1228, %v1350
        %v1394 = vadd.f32 %v1229, %v1352
        %v1395 = vadd.f32 %v1230, %v1355
        %v1396 = vadd.f32 %v1231, %v1357
        %v1397 = vadd.f32 %v1232, %v1360
        %v1398 = vadd.f32 %v1233, %v1362
        %v1399 = vadd.f32 %v1234, %v1365
        %v1400 = vadd.f32 %v1235, %v1367
        %v1401 = vld [vmem:[%s346] sm:$0x1]
        %v1403 = vperm.slane %v1401, 0
        %v1405 = vadd.f32 %v1369, %v1403
        %v1406 = vadd.f32 %v1370, %v1403
        %v1407 = vadd.f32 %v1371, %v1403
        %v1408 = vadd.f32 %v1372, %v1403
        %v1409 = vadd.f32 %v1373, %v1403
        %v1410 = vadd.f32 %v1374, %v1403
        %v1411 = vadd.f32 %v1375, %v1403
        %v1412 = vadd.f32 %v1376, %v1403
        %v1413 = vadd.f32 %v1377, %v1403
        %v1414 = vadd.f32 %v1378, %v1403
        %v1415 = vadd.f32 %v1379, %v1403
        %v1416 = vadd.f32 %v1380, %v1403
        %v1417 = vadd.f32 %v1381, %v1403
        %v1418 = vadd.f32 %v1382, %v1403
        %v1419 = vadd.f32 %v1383, %v1403
        %v1420 = vadd.f32 %v1384, %v1403
        %v1421 = vadd.f32 %v1385, %v1403
        %v1422 = vadd.f32 %v1386, %v1403
        %v1423 = vadd.f32 %v1387, %v1403
        %v1424 = vadd.f32 %v1388, %v1403
        %v1425 = vadd.f32 %v1389, %v1403
        %v1426 = vadd.f32 %v1390, %v1403
        %v1427 = vadd.f32 %v1391, %v1403
        %v1428 = vadd.f32 %v1392, %v1403
        %v1429 = vadd.f32 %v1393, %v1403
        %v1430 = vadd.f32 %v1394, %v1403
        %v1431 = vadd.f32 %v1395, %v1403
        %v1432 = vadd.f32 %v1396, %v1403
        %v1433 = vadd.f32 %v1397, %v1403
        %v1434 = vadd.f32 %v1398, %v1403
        %v1435 = vadd.f32 %v1399, %v1403
        %v1436 = vadd.f32 %v1400, %v1403
        %v1437 = vmax.f32 %v1405, 0.0
        %v1438 = vmax.f32 %v1406, 0.0
        %v1439 = vmax.f32 %v1407, 0.0
        %v1440 = vmax.f32 %v1408, 0.0
        %v1441 = vmax.f32 %v1409, 0.0
        %v1442 = vmax.f32 %v1410, 0.0
        %v1443 = vmax.f32 %v1411, 0.0
        %v1444 = vmax.f32 %v1412, 0.0
        %v1445 = vmax.f32 %v1413, 0.0
        %v1446 = vmax.f32 %v1414, 0.0
        %v1447 = vmax.f32 %v1415, 0.0
        %v1448 = vmax.f32 %v1416, 0.0
        %v1449 = vmax.f32 %v1417, 0.0
        %v1450 = vmax.f32 %v1418, 0.0
        %v1451 = vmax.f32 %v1419, 0.0
        %v1452 = vmax.f32 %v1420, 0.0
        %v1453 = vmax.f32 %v1421, 0.0
        %v1454 = vmax.f32 %v1422, 0.0
        %v1455 = vmax.f32 %v1423, 0.0
        %v1456 = vmax.f32 %v1424, 0.0
        %v1457 = vmax.f32 %v1425, 0.0
        %v1458 = vmax.f32 %v1426, 0.0
        %v1459 = vmax.f32 %v1427, 0.0
        %v1460 = vmax.f32 %v1428, 0.0
        %v1461 = vmax.f32 %v1429, 0.0
        %v1462 = vmax.f32 %v1430, 0.0
        %v1463 = vmax.f32 %v1431, 0.0
        %v1464 = vmax.f32 %v1432, 0.0
        %v1465 = vmax.f32 %v1433, 0.0
        %v1466 = vmax.f32 %v1434, 0.0
        %v1467 = vmax.f32 %v1435, 0.0
        %v1468 = vmax.f32 %v1436, 0.0
        %v1469 = vpack.c.bf16 %v1437, %v1437
        %v1470 = vpack.c.bf16 %v1438, %v1438
        %v1471 = vpack.c.bf16 %v1439, %v1439
        %v1472 = vpack.c.bf16 %v1440, %v1440
        %v1473 = vpack.c.bf16 %v1441, %v1441
        %v1474 = vpack.c.bf16 %v1442, %v1442
        %v1475 = vpack.c.bf16 %v1443, %v1443
        %v1476 = vpack.c.bf16 %v1444, %v1444
        %v1477 = vpack.c.bf16 %v1445, %v1445
        %v1478 = vpack.c.bf16 %v1446, %v1446
        %v1479 = vpack.c.bf16 %v1447, %v1447
        %v1480 = vpack.c.bf16 %v1448, %v1448
        %v1481 = vpack.c.bf16 %v1449, %v1449
        %v1482 = vpack.c.bf16 %v1450, %v1450
        %v1483 = vpack.c.bf16 %v1451, %v1451
        %v1484 = vpack.c.bf16 %v1452, %v1452
        %v1485 = vpack.c.bf16 %v1453, %v1453
        %v1486 = vpack.c.bf16 %v1454, %v1454
        %v1487 = vpack.c.bf16 %v1455, %v1455
        %v1488 = vpack.c.bf16 %v1456, %v1456
        %v1489 = vpack.c.bf16 %v1457, %v1457
        %v1490 = vpack.c.bf16 %v1458, %v1458
        %v1491 = vpack.c.bf16 %v1459, %v1459
        %v1492 = vpack.c.bf16 %v1460, %v1460
        %v1493 = vpack.c.bf16 %v1461, %v1461
        %v1494 = vpack.c.bf16 %v1462, %v1462
        %v1495 = vpack.c.bf16 %v1463, %v1463
        %v1496 = vpack.c.bf16 %v1464, %v1464
        %v1497 = vpack.c.bf16 %v1465, %v1465
        %v1498 = vpack.c.bf16 %v1466, %v1466
        %v1499 = vpack.c.bf16 %v1467, %v1467
        %v1500 = vpack.c.bf16 %v1468, %v1468
        %vm1501 = vcmask 519168
        %1502 = vst.msk [vmem:[%s303] sm:$0xf] %vm1501, %v1469
        %1503 = vst.msk [vmem:[%s303 + $0x4] sm:$0xf] %vm1501, %v1470
        %1504 = vst.msk [vmem:[%s303 + $0x8] sm:$0xf] %vm1501, %v1471
        %1505 = vst.msk [vmem:[%s303 + $0xc] sm:$0xf] %vm1501, %v1472
        %1506 = vst.msk [vmem:[%s303 + $0x10] sm:$0xf] %vm1501, %v1473
        %1507 = vst.msk [vmem:[%s303 + $0x14] sm:$0xf] %vm1501, %v1474
        %1508 = vst.msk [vmem:[%s303 + $0x18] sm:$0xf] %vm1501, %v1475
        %1509 = vst.msk [vmem:[%s303 + $0x1c] sm:$0xf] %vm1501, %v1476
        %1510 = vst.msk [vmem:[%s303 + $0x20] sm:$0xf] %vm1501, %v1477
        %1511 = vst.msk [vmem:[%s303 + $0x24] sm:$0xf] %vm1501, %v1478
        %1512 = vst.msk [vmem:[%s303 + $0x28] sm:$0xf] %vm1501, %v1479
        %1513 = vst.msk [vmem:[%s303 + $0x2c] sm:$0xf] %vm1501, %v1480
        %1514 = vst.msk [vmem:[%s303 + $0x30] sm:$0xf] %vm1501, %v1481
        %1515 = vst.msk [vmem:[%s303 + $0x34] sm:$0xf] %vm1501, %v1482
        %1516 = vst.msk [vmem:[%s303 + $0x38] sm:$0xf] %vm1501, %v1483
        %1517 = vst.msk [vmem:[%s303 + $0x3c] sm:$0xf] %vm1501, %v1484
        %1518 = vst.msk [vmem:[%s303 + $0x40] sm:$0xf] %vm1501, %v1485
        %1519 = vst.msk [vmem:[%s303 + $0x44] sm:$0xf] %vm1501, %v1486
        %1520 = vst.msk [vmem:[%s303 + $0x48] sm:$0xf] %vm1501, %v1487
        %1521 = vst.msk [vmem:[%s303 + $0x4c] sm:$0xf] %vm1501, %v1488
        %1522 = vst.msk [vmem:[%s303 + $0x50] sm:$0xf] %vm1501, %v1489
        %1523 = vst.msk [vmem:[%s303 + $0x54] sm:$0xf] %vm1501, %v1490
        %1524 = vst.msk [vmem:[%s303 + $0x58] sm:$0xf] %vm1501, %v1491
        %1525 = vst.msk [vmem:[%s303 + $0x5c] sm:$0xf] %vm1501, %v1492
        %1526 = vst.msk [vmem:[%s303 + $0x60] sm:$0xf] %vm1501, %v1493
        %1527 = vst.msk [vmem:[%s303 + $0x64] sm:$0xf] %vm1501, %v1494
        %1528 = vst.msk [vmem:[%s303 + $0x68] sm:$0xf] %vm1501, %v1495
        %1529 = vst.msk [vmem:[%s303 + $0x6c] sm:$0xf] %vm1501, %v1496
        %1530 = vst.msk [vmem:[%s303 + $0x70] sm:$0xf] %vm1501, %v1497
        %1531 = vst.msk [vmem:[%s303 + $0x74] sm:$0xf] %vm1501, %v1498
        %1532 = vst.msk [vmem:[%s303 + $0x78] sm:$0xf] %vm1501, %v1499
        %1533 = vst.msk [vmem:[%s303 + $0x7c] sm:$0xf] %vm1501, %v1500
        %s1534 = sand.u32 %s161, 1
        %s1535 = scalar_lea.sflag [#allocation3], %s1534
        %s1536 = sand.u32 %s161, 1
        %s1537 = smul.addr %s1536, 128
        %s1538 = scalar_lea.vmem [#allocation2], %s1537
        // Predicated region
        $region37: #{tpu_custom_call.1} parent=35 // pred_check
          %p1539 = pneg %p171
        $region38: #{tpu_custom_call.1} parent=35 // pred_check_branch
          %1541 = sbr.rel (%p1539) target = $region40
        $region39: #{tpu_custom_call.1} parent=35 // pred_region
          %s1542 = smul.u32 16, %s24
          %1544 = vsyncadd %s1535, 0
          %s1545 = smul.addr %s1542, 2
          %s1546 = sadd.s32 %s25, %s1545
          %s1547 = smul.addr %s23, 32
          %s1548 = sadd.s32 %s1546, %s1547
          %s1549 = smul.addr %s1548, 4
          %s1550 = scalar_lea.hbm %s4, %s1549
          %s1551 = sshll.u32 %s1538, 4
          %s1552 = int_to_ptr.vmem [resolvable:$true] %s1551
          %s1553 = sshll.u32 %s1550, 4
          %s1554 = int_to_ptr.hbm [resolvable:$true] %s1553
          %1559 = dma.vmem_to_hbm [thread:$0]  %s1552, 2048, %s1554, %s1535, 64, 64, 4
        $region40: #{tpu_custom_call.1} parent=35 // pred_fallthru
          _
      $region36: #{tpu_custom_call.1} parent=5 // pred_fallthru
        _
      %p1560 = scmp.le.s32.totalorder 2, %s13
      // Predicated region
      $region41: #{tpu_custom_call.1} parent=5 // pred_check
        %p1561 = pneg %p1560
      $region42: #{tpu_custom_call.1} parent=5 // pred_check_branch
        %1563 = sbr.rel (%p1561) target = $region44
      $region43: #{tpu_custom_call.1} parent=5 // pred_region
        %s1564 = ssub.s32 %s13, 2
        // Predicated region
        $region45: #{tpu_custom_call.1} parent=43 // pred_check
          %p1565 = pneg %p177
        $region46: #{tpu_custom_call.1} parent=43 // pred_check_branch
          %1567 = sbr.rel (%p1565) target = $region48
        $region47: #{tpu_custom_call.1} parent=43 // pred_region
          %s1568 = sand.u32 %s162, 1
          %s1569 = scalar_lea.sflag [#allocation3], %s1568
          %s1570 = sand.u32 %s162, 1
          %s1571 = smul.addr %s1570, 128
          %s1572 = scalar_lea.vmem [#allocation2], %s1571
          %1574 = dma.done %s1569, 2048
        $region48: #{tpu_custom_call.1} parent=43 // pred_fallthru
          _
      $region44: #{tpu_custom_call.1} parent=5 // pred_fallthru
        _
    $region6: #{tpu_custom_call.1} parent=1 // loop_footer
      %s17 = sadd.s32 1, %s13
    $region7: #{tpu_custom_call.1} parent=1 // loop_footer_branch
      %12 = sbr.rel target = $region3
    $region8: #{tpu_custom_call.1} parent=1 // loop_exit
      _
    %1575 = vsyncpa [#allocation3], 1
    %s1576 = scalar_lea.sflag [#allocation3], 1
    %1577 = vsyncpa %s1576, 1

</llo_original>
